<compile_context>
chip_gen: v7x
topology: tpu7x:2x2x1
jax: 0.10.0
libtpu: 0.0.40
codegen_flags: <defaults>
</compile_context>

<pallas_src>
import math
from functools import partial

import jax
import jax.numpy as jnp
from jax.experimental import pallas as pl
from jax.experimental.pallas import tpu as pltpu

LN_EPS = 1e-5  # PyTorch nn.LayerNorm default


# ----------------------------------------------------------------------------
# PositionalEncoding buffer — mirrors the torch module exactly.
# (Note: the module uses log(max_len)/channels, not the textbook log(10000);
#  we match the module, which is the spec.)
# ----------------------------------------------------------------------------
def make_positional_encoding(channels: int, max_len: int = 10000) -> jnp.ndarray:
    position = jnp.arange(0, max_len, dtype=jnp.float32)[:, None]            # (L, 1)
    div_term = jnp.exp(
        jnp.arange(0, channels, 2, dtype=jnp.float32)
        * -(math.log(float(max_len)) / channels)
    )                                                                         # (C/2,)
    angles = position * div_term                                              # (L, C/2)
    pe = jnp.zeros((max_len, channels), dtype=jnp.float32)
    pe = pe.at[:, 0::2].set(jnp.sin(angles))
    pe = pe.at[:, 1::2].set(jnp.cos(angles))
    return pe


def _layer_norm(x, gamma, beta):
    mu = jnp.mean(x, axis=-1, keepdims=True)
    var = jnp.mean(jnp.square(x - mu), axis=-1, keepdims=True)
    return (x - mu) * jax.lax.rsqrt(var + LN_EPS) * gamma + beta


# ----------------------------------------------------------------------------
# Fused kernel: one batch element (T, C) per grid step.
# ----------------------------------------------------------------------------
def _mhsa_kernel(n_head,
                 x_ref, pe_ref, g1_ref, b1_ref, wqkv_ref, bqkv_ref,
                 wo_ref, bo_ref, g2_ref, b2_ref, o_ref):
    x = x_ref[0]                              # (T, C), pre-transposed input
    T, C = x.shape
    D = C // n_head
    scale = 1.0 / math.sqrt(D)

    # LayerNorm1 + positional encoding (fused VPU work)
    h = _layer_norm(x, g1_ref[...], b1_ref[...]) + pe_ref[...]        # (T, C)

    # QKV projection (single MXU matmul against pre-transposed in_proj weight)
    qkv = jnp.dot(h, wqkv_ref[...], preferred_element_type=jnp.float32) + bqkv_ref[...]
    q = qkv[:, :C] * scale
    k = qkv[:, C:2 * C]
    v = qkv[:, 2 * C:]

    # Per-head scaled dot-product attention (heads statically unrolled).
    outs = []
    for hd in range(n_head):
        sl = slice(hd * D, (hd + 1) * D)
        qh, kh, vh = q[:, sl], k[:, sl], v[:, sl]                     # (T, D)
        s = jax.lax.dot_general(qh, kh, (((1,), (1,)), ((), ())),
                                preferred_element_type=jnp.float32)   # (T, T)
        s = s - jnp.max(s, axis=-1, keepdims=True)
        e = jnp.exp(s)
        p = e / jnp.sum(e, axis=-1, keepdims=True)
        outs.append(jnp.dot(p, vh, preferred_element_type=jnp.float32))
    attn = jnp.concatenate(outs, axis=-1)                             # (T, C)

    # Output projection
    attn = jnp.dot(attn, wo_ref[...], preferred_element_type=jnp.float32) + bo_ref[...]

    # inner residual + LayerNorm2 + outer residual (all in (T, C) layout)
    y = _layer_norm(attn + h, g2_ref[...], b2_ref[...]) + x
    o_ref[0] = y.astype(o_ref.dtype)


# ----------------------------------------------------------------------------
# Wrapper
# ----------------------------------------------------------------------------
def multi_head_self_attention_forward(x, params, n_head: int = 8):
    """x: (B, C, T) as consumed by the PyTorch module. Returns (B, C, T)."""
    B, C, T = x.shape
    assert C % n_head == 0

    xt = jnp.transpose(x, (0, 2, 1)).astype(jnp.float32)   # (B, T, C) layout glue
    pe = params["pe"][:T, :].astype(jnp.float32)            # (T, C), cast once

    g1 = params["ln1_gamma"].reshape(1, C).astype(jnp.float32)
    b1 = params["ln1_beta"].reshape(1, C).astype(jnp.float32)
    g2 = params["ln2_gamma"].reshape(1, C).astype(jnp.float32)
    b2 = params["ln2_beta"].reshape(1, C).astype(jnp.float32)
    wqkv_t = params["in_proj_weight"].T.astype(jnp.float32)          # (C, 3C)
    bqkv = params["in_proj_bias"].reshape(1, 3 * C).astype(jnp.float32)
    wo_t = params["out_proj_weight"].T.astype(jnp.float32)           # (C, C)
    bo = params["out_proj_bias"].reshape(1, C).astype(jnp.float32)

    def const_spec(shape):
        # Same block for every grid step -> stays resident, no re-DMA per batch.
        return pl.BlockSpec(shape, lambda b: (0,) * len(shape))

    yt = pl.pallas_call(
        partial(_mhsa_kernel, n_head),
        out_shape=jax.ShapeDtypeStruct((B, T, C), jnp.float32),
        grid_spec=pl.GridSpec(
            grid=(B,),
            in_specs=[
                pl.BlockSpec((1, T, C), lambda b: (b, 0, 0)),  # x_t: one batch element
                const_spec((T, C)),          # pe
                const_spec((1, C)),          # ln1 gamma
                const_spec((1, C)),          # ln1 beta
                const_spec((C, 3 * C)),      # W_qkv^T
                const_spec((1, 3 * C)),      # b_qkv
                const_spec((C, C)),          # W_out^T
                const_spec((1, C)),          # b_out
                const_spec((1, C)),          # ln2 gamma
                const_spec((1, C)),          # ln2 beta
            ],
            out_specs=pl.BlockSpec((1, T, C), lambda b: (b, 0, 0)),
        ),
        input_output_aliases={0: 0},         # write output in place over x_t temp
        compiler_params=pltpu.CompilerParams(
            dimension_semantics=("parallel",),
        ),
    )(xt, pe, g1, b1, wqkv_t, bqkv, wo_t, bo, g2, b2)

    # Transpose back to (B, C, T). The outer residual (+ original x) was already
    # added inside the kernel in (T, C) layout.
    return jnp.transpose(yt, (0, 2, 1)).astype(x.dtype)


# ----------------------------------------------------------------------------
# Pure-JAX reference (mirrors PyTorch eval-mode forward)
# ----------------------------------------------------------------------------
def mhsa_ref(x, params, n_head: int = 8):
    B, C, T = x.shape
    D = C // n_head
    hi = jax.lax.Precision.HIGHEST

    def ln(z, g, b):
        mu = jnp.mean(z, axis=-1, keepdims=True)
        var = jnp.mean(jnp.square(z - mu), axis=-1, keepdims=True)
        return (z - mu) * jax.lax.rsqrt(var + LN_EPS) * g + b

    xt = jnp.transpose(x, (0, 2, 1)).astype(jnp.float32)                     # (B, T, C)
    h = ln(xt, params["ln1_gamma"], params["ln1_beta"]) + params["pe"][None, :T, :]

    qkv = jnp.einsum("btc,dc->btd", h, params["in_proj_weight"],
                     precision=hi) + params["in_proj_bias"]
    q, k, v = jnp.split(qkv, 3, axis=-1)
    q = q.reshape(B, T, n_head, D).transpose(0, 2, 1, 3) / math.sqrt(D)
    k = k.reshape(B, T, n_head, D).transpose(0, 2, 1, 3)
    v = v.reshape(B, T, n_head, D).transpose(0, 2, 1, 3)

    s = jnp.einsum("bhtd,bhsd->bhts", q, k, precision=hi)
    p = jax.nn.softmax(s, axis=-1)
    o = jnp.einsum("bhts,bhsd->bhtd", p, v, precision=hi)
    o = o.transpose(0, 2, 1, 3).reshape(B, T, C)

    attn = jnp.einsum("btc,dc->btd", o, params["out_proj_weight"],
                      precision=hi) + params["out_proj_bias"]
    y = ln(attn + h, params["ln2_gamma"], params["ln2_beta"]) + xt
    return jnp.transpose(y, (0, 2, 1)).astype(x.dtype)


if __name__ == "__main__":
    # Small shapes consistent with the module: batch=2, in_chan=32, seq=8, n_head=8.
    B, C, T, H = 2, 32, 8, 8
    max_len = 10000

    key = jax.random.PRNGKey(0)
    k_x, k_w1, k_b1, k_w2, k_b2, k_g1, k_be1, k_g2, k_be2 = jax.random.split(key, 9)

    x = jax.random.normal(k_x, (B, C, T), dtype=jnp.float32)

    params = {
        "pe": make_positional_encoding(C, max_len),
        "ln1_gamma": 1.0 + 0.1 * jax.random.normal(k_g1, (C,), jnp.float32),
        "ln1_beta": 0.1 * jax.random.normal(k_be1, (C,), jnp.float32),
        "in_proj_weight": 0.1 * jax.random.normal(k_w1, (3 * C, C), jnp.float32),
        "in_proj_bias": 0.1 * jax.random.normal(k_b1, (3 * C,), jnp.float32),
        "out_proj_weight": 0.1 * jax.random.normal(k_w2, (C, C), jnp.float32),
        "out_proj_bias": 0.1 * jax.random.normal(k_b2, (C,), jnp.float32),
        "ln2_gamma": 1.0 + 0.1 * jax.random.normal(k_g2, (C,), jnp.float32),
        "ln2_beta": 0.1 * jax.random.normal(k_be2, (C,), jnp.float32),
    }

    fwd = jax.jit(multi_head_self_attention_forward, static_argnames=("n_head",))
    out = fwd(x, params, n_head=H)
    out = jax.block_until_ready(out)

    ref = mhsa_ref(x, params, n_head=H)
    assert out.shape == (B, C, T)
    assert jnp.allclose(out, ref, atol=1e-3, rtol=1e-3), (
        f"mismatch vs reference, max abs err = {jnp.max(jnp.abs(out - ref))}"
    )

    print("KERNEL_OK")
</pallas_src>

<mosaic_0001>
module attributes {stable_mosaic.version = 11 : i64} {
  func.func @_mhsa_kernel(%arg0: i32, %arg1: memref<1x8x32xf32, #tpu.memory_space<vmem>>, %arg2: memref<8x32xf32, #tpu.memory_space<vmem>>, %arg3: memref<1x32xf32, #tpu.memory_space<vmem>>, %arg4: memref<1x32xf32, #tpu.memory_space<vmem>>, %arg5: memref<32x96xf32, #tpu.memory_space<vmem>>, %arg6: memref<1x96xf32, #tpu.memory_space<vmem>>, %arg7: memref<32x32xf32, #tpu.memory_space<vmem>>, %arg8: memref<1x32xf32, #tpu.memory_space<vmem>>, %arg9: memref<1x32xf32, #tpu.memory_space<vmem>>, %arg10: memref<1x32xf32, #tpu.memory_space<vmem>>, %arg11: memref<1x8x32xf32, #tpu.memory_space<vmem>>) attributes {dimension_semantics = [#tpu.dimension_semantics<parallel>], iteration_bounds = array<i64: 2>, scalar_prefetch = 0 : i64, scratch_operands = 0 : i64, tpu.core_type = #tpu.core_type<tc>, window_params = [{transform_indices = @transform_0, window_bounds = array<i64: 1, 8, 32>}, {pipeline_mode = #tpu.pipeline_mode<synchronous>, transform_indices = @transform_1, window_bounds = array<i64: 8, 32>}, {pipeline_mode = #tpu.pipeline_mode<synchronous>, transform_indices = @transform_2, window_bounds = array<i64: 1, 32>}, {pipeline_mode = #tpu.pipeline_mode<synchronous>, transform_indices = @transform_3, window_bounds = array<i64: 1, 32>}, {pipeline_mode = #tpu.pipeline_mode<synchronous>, transform_indices = @transform_4, window_bounds = array<i64: 32, 96>}, {pipeline_mode = #tpu.pipeline_mode<synchronous>, transform_indices = @transform_5, window_bounds = array<i64: 1, 96>}, {pipeline_mode = #tpu.pipeline_mode<synchronous>, transform_indices = @transform_6, window_bounds = array<i64: 32, 32>}, {pipeline_mode = #tpu.pipeline_mode<synchronous>, transform_indices = @transform_7, window_bounds = array<i64: 1, 32>}, {pipeline_mode = #tpu.pipeline_mode<synchronous>, transform_indices = @transform_8, window_bounds = array<i64: 1, 32>}, {pipeline_mode = #tpu.pipeline_mode<synchronous>, transform_indices = @transform_9, window_bounds = array<i64: 1, 32>}, {transform_indices = @transform_10, window_bounds = array<i64: 1, 8, 32>}]} {
    %c0 = arith.constant 0 : index
    %c0_0 = arith.constant 0 : index
    %c0_1 = arith.constant 0 : index
    %0 = vector.load %arg1[%c0, %c0_0, %c0_1] : memref<1x8x32xf32, #tpu.memory_space<vmem>>, vector<1x8x32xf32>
    %1 = vector.shape_cast %0 : vector<1x8x32xf32> to vector<8x32xf32>
    %c0_2 = arith.constant 0 : index
    %c0_3 = arith.constant 0 : index
    %2 = vector.load %arg3[%c0_2, %c0_3] : memref<1x32xf32, #tpu.memory_space<vmem>>, vector<1x32xf32>
    %c0_4 = arith.constant 0 : index
    %c0_5 = arith.constant 0 : index
    %3 = vector.load %arg4[%c0_4, %c0_5] : memref<1x32xf32, #tpu.memory_space<vmem>>, vector<1x32xf32>
    %cst = arith.constant dense<0.000000e+00> : vector<8xf32>
    %4 = vector.multi_reduction <add>, %1, %cst [1] : vector<8x32xf32> to vector<8xf32>
    %5 = vector.shape_cast %4 : vector<8xf32> to vector<8x1xf32>
    %cst_6 = arith.constant 3.200000e+01 : f32
    %6 = vector.broadcast %cst_6 : f32 to vector<8x1xf32>
    %7 = arith.divf %5, %6 : vector<8x1xf32>
    %8 = vector.broadcast %7 : vector<8x1xf32> to vector<8x32xf32>
    %9 = arith.subf %1, %8 : vector<8x32xf32>
    %10 = arith.mulf %9, %9 : vector<8x32xf32>
    %cst_7 = arith.constant dense<0.000000e+00> : vector<8xf32>
    %11 = vector.multi_reduction <add>, %10, %cst_7 [1] : vector<8x32xf32> to vector<8xf32>
    %12 = vector.shape_cast %11 : vector<8xf32> to vector<8x1xf32>
    %cst_8 = arith.constant 3.200000e+01 : f32
    %13 = vector.broadcast %cst_8 : f32 to vector<8x1xf32>
    %14 = arith.divf %12, %13 : vector<8x1xf32>
    %15 = vector.broadcast %7 : vector<8x1xf32> to vector<8x32xf32>
    %16 = arith.subf %1, %15 : vector<8x32xf32>
    %cst_9 = arith.constant 9.99999974E-6 : f32
    %17 = vector.broadcast %cst_9 : f32 to vector<8x1xf32>
    %18 = arith.addf %14, %17 : vector<8x1xf32>
    %19 = math.rsqrt %18 : vector<8x1xf32>
    %20 = vector.broadcast %19 : vector<8x1xf32> to vector<8x32xf32>
    %21 = arith.mulf %16, %20 : vector<8x32xf32>
    %22 = vector.broadcast %2 : vector<1x32xf32> to vector<8x32xf32>
    %23 = arith.mulf %21, %22 : vector<8x32xf32>
    %24 = vector.broadcast %3 : vector<1x32xf32> to vector<8x32xf32>
    %25 = arith.addf %23, %24 : vector<8x32xf32>
    %c0_10 = arith.constant 0 : index
    %c0_11 = arith.constant 0 : index
    %26 = vector.load %arg2[%c0_10, %c0_11] : memref<8x32xf32, #tpu.memory_space<vmem>>, vector<8x32xf32>
    %27 = arith.addf %25, %26 : vector<8x32xf32>
    %c0_12 = arith.constant 0 : index
    %c0_13 = arith.constant 0 : index
    %28 = vector.load %arg5[%c0_12, %c0_13] : memref<32x96xf32, #tpu.memory_space<vmem>>, vector<32x96xf32>
    %cst_14 = arith.constant dense<0.000000e+00> : vector<8x96xf32>
    %29 = tpu.matmul %27, %28, %cst_14 {dimension_numbers = #tpu.dot_dimension_numbers<[1], [0], [0], [1], [0, 0, 1, 1], [], []>} : vector<8x32xf32>, vector<32x96xf32>, vector<8x96xf32> -> vector<8x96xf32>
    %c0_15 = arith.constant 0 : index
    %c0_16 = arith.constant 0 : index
    %30 = vector.load %arg6[%c0_15, %c0_16] : memref<1x96xf32, #tpu.memory_space<vmem>>, vector<1x96xf32>
    %31 = vector.broadcast %30 : vector<1x96xf32> to vector<8x96xf32>
    %32 = arith.addf %29, %31 : vector<8x96xf32>
    %33 = vector.extract_strided_slice %32 {offsets = [0, 0], sizes = [8, 32], strides = [1, 1]} : vector<8x96xf32> to vector<8x32xf32>
    %cst_17 = arith.constant 5.000000e-01 : f32
    %34 = vector.broadcast %cst_17 : f32 to vector<8x32xf32>
    %35 = arith.mulf %33, %34 : vector<8x32xf32>
    %36 = vector.extract_strided_slice %32 {offsets = [0, 32], sizes = [8, 32], strides = [1, 1]} : vector<8x96xf32> to vector<8x32xf32>
    %37 = vector.extract_strided_slice %32 {offsets = [0, 64], sizes = [8, 32], strides = [1, 1]} : vector<8x96xf32> to vector<8x32xf32>
    %38 = vector.extract_strided_slice %35 {offsets = [0, 0], sizes = [8, 4], strides = [1, 1]} : vector<8x32xf32> to vector<8x4xf32>
    %39 = vector.extract_strided_slice %36 {offsets = [0, 0], sizes = [8, 4], strides = [1, 1]} : vector<8x32xf32> to vector<8x4xf32>
    %40 = vector.extract_strided_slice %37 {offsets = [0, 0], sizes = [8, 4], strides = [1, 1]} : vector<8x32xf32> to vector<8x4xf32>
    %cst_18 = arith.constant dense<0.000000e+00> : vector<8x8xf32>
    %41 = tpu.matmul %38, %39, %cst_18 {dimension_numbers = #tpu.dot_dimension_numbers<[1], [1], [0], [0], [0, 0, 1, 0], [], []>} : vector<8x4xf32>, vector<8x4xf32>, vector<8x8xf32> -> vector<8x8xf32>
    %cst_19 = arith.constant dense<0xFF800000> : vector<8xf32>
    %42 = vector.multi_reduction <maximumf>, %41, %cst_19 [1] : vector<8x8xf32> to vector<8xf32>
    %43 = vector.shape_cast %42 : vector<8xf32> to vector<8x1xf32>
    %44 = vector.broadcast %43 : vector<8x1xf32> to vector<8x8xf32>
    %45 = arith.subf %41, %44 : vector<8x8xf32>
    %46 = math.exp %45 : vector<8x8xf32>
    %cst_20 = arith.constant dense<0.000000e+00> : vector<8xf32>
    %47 = vector.multi_reduction <add>, %46, %cst_20 [1] : vector<8x8xf32> to vector<8xf32>
    %48 = vector.shape_cast %47 : vector<8xf32> to vector<8x1xf32>
    %49 = vector.broadcast %48 : vector<8x1xf32> to vector<8x8xf32>
    %50 = arith.divf %46, %49 : vector<8x8xf32>
    %cst_21 = arith.constant dense<0.000000e+00> : vector<8x4xf32>
    %51 = tpu.matmul %50, %40, %cst_21 {dimension_numbers = #tpu.dot_dimension_numbers<[1], [0], [0], [1], [0, 0, 1, 1], [], []>} : vector<8x8xf32>, vector<8x4xf32>, vector<8x4xf32> -> vector<8x4xf32>
    %52 = vector.extract_strided_slice %35 {offsets = [0, 4], sizes = [8, 4], strides = [1, 1]} : vector<8x32xf32> to vector<8x4xf32>
    %53 = vector.extract_strided_slice %36 {offsets = [0, 4], sizes = [8, 4], strides = [1, 1]} : vector<8x32xf32> to vector<8x4xf32>
    %54 = vector.extract_strided_slice %37 {offsets = [0, 4], sizes = [8, 4], strides = [1, 1]} : vector<8x32xf32> to vector<8x4xf32>
    %cst_22 = arith.constant dense<0.000000e+00> : vector<8x8xf32>
    %55 = tpu.matmul %52, %53, %cst_22 {dimension_numbers = #tpu.dot_dimension_numbers<[1], [1], [0], [0], [0, 0, 1, 0], [], []>} : vector<8x4xf32>, vector<8x4xf32>, vector<8x8xf32> -> vector<8x8xf32>
    %cst_23 = arith.constant dense<0xFF800000> : vector<8xf32>
    %56 = vector.multi_reduction <maximumf>, %55, %cst_23 [1] : vector<8x8xf32> to vector<8xf32>
    %57 = vector.shape_cast %56 : vector<8xf32> to vector<8x1xf32>
    %58 = vector.broadcast %57 : vector<8x1xf32> to vector<8x8xf32>
    %59 = arith.subf %55, %58 : vector<8x8xf32>
    %60 = math.exp %59 : vector<8x8xf32>
    %cst_24 = arith.constant dense<0.000000e+00> : vector<8xf32>
    %61 = vector.multi_reduction <add>, %60, %cst_24 [1] : vector<8x8xf32> to vector<8xf32>
    %62 = vector.shape_cast %61 : vector<8xf32> to vector<8x1xf32>
    %63 = vector.broadcast %62 : vector<8x1xf32> to vector<8x8xf32>
    %64 = arith.divf %60, %63 : vector<8x8xf32>
    %cst_25 = arith.constant dense<0.000000e+00> : vector<8x4xf32>
    %65 = tpu.matmul %64, %54, %cst_25 {dimension_numbers = #tpu.dot_dimension_numbers<[1], [0], [0], [1], [0, 0, 1, 1], [], []>} : vector<8x8xf32>, vector<8x4xf32>, vector<8x4xf32> -> vector<8x4xf32>
    %66 = vector.extract_strided_slice %35 {offsets = [0, 8], sizes = [8, 4], strides = [1, 1]} : vector<8x32xf32> to vector<8x4xf32>
    %67 = vector.extract_strided_slice %36 {offsets = [0, 8], sizes = [8, 4], strides = [1, 1]} : vector<8x32xf32> to vector<8x4xf32>
    %68 = vector.extract_strided_slice %37 {offsets = [0, 8], sizes = [8, 4], strides = [1, 1]} : vector<8x32xf32> to vector<8x4xf32>
    %cst_26 = arith.constant dense<0.000000e+00> : vector<8x8xf32>
    %69 = tpu.matmul %66, %67, %cst_26 {dimension_numbers = #tpu.dot_dimension_numbers<[1], [1], [0], [0], [0, 0, 1, 0], [], []>} : vector<8x4xf32>, vector<8x4xf32>, vector<8x8xf32> -> vector<8x8xf32>
    %cst_27 = arith.constant dense<0xFF800000> : vector<8xf32>
    %70 = vector.multi_reduction <maximumf>, %69, %cst_27 [1] : vector<8x8xf32> to vector<8xf32>
    %71 = vector.shape_cast %70 : vector<8xf32> to vector<8x1xf32>
    %72 = vector.broadcast %71 : vector<8x1xf32> to vector<8x8xf32>
    %73 = arith.subf %69, %72 : vector<8x8xf32>
    %74 = math.exp %73 : vector<8x8xf32>
    %cst_28 = arith.constant dense<0.000000e+00> : vector<8xf32>
    %75 = vector.multi_reduction <add>, %74, %cst_28 [1] : vector<8x8xf32> to vector<8xf32>
    %76 = vector.shape_cast %75 : vector<8xf32> to vector<8x1xf32>
    %77 = vector.broadcast %76 : vector<8x1xf32> to vector<8x8xf32>
    %78 = arith.divf %74, %77 : vector<8x8xf32>
    %cst_29 = arith.constant dense<0.000000e+00> : vector<8x4xf32>
    %79 = tpu.matmul %78, %68, %cst_29 {dimension_numbers = #tpu.dot_dimension_numbers<[1], [0], [0], [1], [0, 0, 1, 1], [], []>} : vector<8x8xf32>, vector<8x4xf32>, vector<8x4xf32> -> vector<8x4xf32>
    %80 = vector.extract_strided_slice %35 {offsets = [0, 12], sizes = [8, 4], strides = [1, 1]} : vector<8x32xf32> to vector<8x4xf32>
    %81 = vector.extract_strided_slice %36 {offsets = [0, 12], sizes = [8, 4], strides = [1, 1]} : vector<8x32xf32> to vector<8x4xf32>
    %82 = vector.extract_strided_slice %37 {offsets = [0, 12], sizes = [8, 4], strides = [1, 1]} : vector<8x32xf32> to vector<8x4xf32>
    %cst_30 = arith.constant dense<0.000000e+00> : vector<8x8xf32>
    %83 = tpu.matmul %80, %81, %cst_30 {dimension_numbers = #tpu.dot_dimension_numbers<[1], [1], [0], [0], [0, 0, 1, 0], [], []>} : vector<8x4xf32>, vector<8x4xf32>, vector<8x8xf32> -> vector<8x8xf32>
    %cst_31 = arith.constant dense<0xFF800000> : vector<8xf32>
    %84 = vector.multi_reduction <maximumf>, %83, %cst_31 [1] : vector<8x8xf32> to vector<8xf32>
    %85 = vector.shape_cast %84 : vector<8xf32> to vector<8x1xf32>
    %86 = vector.broadcast %85 : vector<8x1xf32> to vector<8x8xf32>
    %87 = arith.subf %83, %86 : vector<8x8xf32>
    %88 = math.exp %87 : vector<8x8xf32>
    %cst_32 = arith.constant dense<0.000000e+00> : vector<8xf32>
    %89 = vector.multi_reduction <add>, %88, %cst_32 [1] : vector<8x8xf32> to vector<8xf32>
    %90 = vector.shape_cast %89 : vector<8xf32> to vector<8x1xf32>
    %91 = vector.broadcast %90 : vector<8x1xf32> to vector<8x8xf32>
    %92 = arith.divf %88, %91 : vector<8x8xf32>
    %cst_33 = arith.constant dense<0.000000e+00> : vector<8x4xf32>
    %93 = tpu.matmul %92, %82, %cst_33 {dimension_numbers = #tpu.dot_dimension_numbers<[1], [0], [0], [1], [0, 0, 1, 1], [], []>} : vector<8x8xf32>, vector<8x4xf32>, vector<8x4xf32> -> vector<8x4xf32>
    %94 = vector.extract_strided_slice %35 {offsets = [0, 16], sizes = [8, 4], strides = [1, 1]} : vector<8x32xf32> to vector<8x4xf32>
    %95 = vector.extract_strided_slice %36 {offsets = [0, 16], sizes = [8, 4], strides = [1, 1]} : vector<8x32xf32> to vector<8x4xf32>
    %96 = vector.extract_strided_slice %37 {offsets = [0, 16], sizes = [8, 4], strides = [1, 1]} : vector<8x32xf32> to vector<8x4xf32>
    %cst_34 = arith.constant dense<0.000000e+00> : vector<8x8xf32>
    %97 = tpu.matmul %94, %95, %cst_34 {dimension_numbers = #tpu.dot_dimension_numbers<[1], [1], [0], [0], [0, 0, 1, 0], [], []>} : vector<8x4xf32>, vector<8x4xf32>, vector<8x8xf32> -> vector<8x8xf32>
    %cst_35 = arith.constant dense<0xFF800000> : vector<8xf32>
    %98 = vector.multi_reduction <maximumf>, %97, %cst_35 [1] : vector<8x8xf32> to vector<8xf32>
    %99 = vector.shape_cast %98 : vector<8xf32> to vector<8x1xf32>
    %100 = vector.broadcast %99 : vector<8x1xf32> to vector<8x8xf32>
    %101 = arith.subf %97, %100 : vector<8x8xf32>
    %102 = math.exp %101 : vector<8x8xf32>
    %cst_36 = arith.constant dense<0.000000e+00> : vector<8xf32>
    %103 = vector.multi_reduction <add>, %102, %cst_36 [1] : vector<8x8xf32> to vector<8xf32>
    %104 = vector.shape_cast %103 : vector<8xf32> to vector<8x1xf32>
    %105 = vector.broadcast %104 : vector<8x1xf32> to vector<8x8xf32>
    %106 = arith.divf %102, %105 : vector<8x8xf32>
    %cst_37 = arith.constant dense<0.000000e+00> : vector<8x4xf32>
    %107 = tpu.matmul %106, %96, %cst_37 {dimension_numbers = #tpu.dot_dimension_numbers<[1], [0], [0], [1], [0, 0, 1, 1], [], []>} : vector<8x8xf32>, vector<8x4xf32>, vector<8x4xf32> -> vector<8x4xf32>
    %108 = vector.extract_strided_slice %35 {offsets = [0, 20], sizes = [8, 4], strides = [1, 1]} : vector<8x32xf32> to vector<8x4xf32>
    %109 = vector.extract_strided_slice %36 {offsets = [0, 20], sizes = [8, 4], strides = [1, 1]} : vector<8x32xf32> to vector<8x4xf32>
    %110 = vector.extract_strided_slice %37 {offsets = [0, 20], sizes = [8, 4], strides = [1, 1]} : vector<8x32xf32> to vector<8x4xf32>
    %cst_38 = arith.constant dense<0.000000e+00> : vector<8x8xf32>
    %111 = tpu.matmul %108, %109, %cst_38 {dimension_numbers = #tpu.dot_dimension_numbers<[1], [1], [0], [0], [0, 0, 1, 0], [], []>} : vector<8x4xf32>, vector<8x4xf32>, vector<8x8xf32> -> vector<8x8xf32>
    %cst_39 = arith.constant dense<0xFF800000> : vector<8xf32>
    %112 = vector.multi_reduction <maximumf>, %111, %cst_39 [1] : vector<8x8xf32> to vector<8xf32>
    %113 = vector.shape_cast %112 : vector<8xf32> to vector<8x1xf32>
    %114 = vector.broadcast %113 : vector<8x1xf32> to vector<8x8xf32>
    %115 = arith.subf %111, %114 : vector<8x8xf32>
    %116 = math.exp %115 : vector<8x8xf32>
    %cst_40 = arith.constant dense<0.000000e+00> : vector<8xf32>
    %117 = vector.multi_reduction <add>, %116, %cst_40 [1] : vector<8x8xf32> to vector<8xf32>
    %118 = vector.shape_cast %117 : vector<8xf32> to vector<8x1xf32>
    %119 = vector.broadcast %118 : vector<8x1xf32> to vector<8x8xf32>
    %120 = arith.divf %116, %119 : vector<8x8xf32>
    %cst_41 = arith.constant dense<0.000000e+00> : vector<8x4xf32>
    %121 = tpu.matmul %120, %110, %cst_41 {dimension_numbers = #tpu.dot_dimension_numbers<[1], [0], [0], [1], [0, 0, 1, 1], [], []>} : vector<8x8xf32>, vector<8x4xf32>, vector<8x4xf32> -> vector<8x4xf32>
    %122 = vector.extract_strided_slice %35 {offsets = [0, 24], sizes = [8, 4], strides = [1, 1]} : vector<8x32xf32> to vector<8x4xf32>
    %123 = vector.extract_strided_slice %36 {offsets = [0, 24], sizes = [8, 4], strides = [1, 1]} : vector<8x32xf32> to vector<8x4xf32>
    %124 = vector.extract_strided_slice %37 {offsets = [0, 24], sizes = [8, 4], strides = [1, 1]} : vector<8x32xf32> to vector<8x4xf32>
    %cst_42 = arith.constant dense<0.000000e+00> : vector<8x8xf32>
    %125 = tpu.matmul %122, %123, %cst_42 {dimension_numbers = #tpu.dot_dimension_numbers<[1], [1], [0], [0], [0, 0, 1, 0], [], []>} : vector<8x4xf32>, vector<8x4xf32>, vector<8x8xf32> -> vector<8x8xf32>
    %cst_43 = arith.constant dense<0xFF800000> : vector<8xf32>
    %126 = vector.multi_reduction <maximumf>, %125, %cst_43 [1] : vector<8x8xf32> to vector<8xf32>
    %127 = vector.shape_cast %126 : vector<8xf32> to vector<8x1xf32>
    %128 = vector.broadcast %127 : vector<8x1xf32> to vector<8x8xf32>
    %129 = arith.subf %125, %128 : vector<8x8xf32>
    %130 = math.exp %129 : vector<8x8xf32>
    %cst_44 = arith.constant dense<0.000000e+00> : vector<8xf32>
    %131 = vector.multi_reduction <add>, %130, %cst_44 [1] : vector<8x8xf32> to vector<8xf32>
    %132 = vector.shape_cast %131 : vector<8xf32> to vector<8x1xf32>
    %133 = vector.broadcast %132 : vector<8x1xf32> to vector<8x8xf32>
    %134 = arith.divf %130, %133 : vector<8x8xf32>
    %cst_45 = arith.constant dense<0.000000e+00> : vector<8x4xf32>
    %135 = tpu.matmul %134, %124, %cst_45 {dimension_numbers = #tpu.dot_dimension_numbers<[1], [0], [0], [1], [0, 0, 1, 1], [], []>} : vector<8x8xf32>, vector<8x4xf32>, vector<8x4xf32> -> vector<8x4xf32>
    %136 = vector.extract_strided_slice %35 {offsets = [0, 28], sizes = [8, 4], strides = [1, 1]} : vector<8x32xf32> to vector<8x4xf32>
    %137 = vector.extract_strided_slice %36 {offsets = [0, 28], sizes = [8, 4], strides = [1, 1]} : vector<8x32xf32> to vector<8x4xf32>
    %138 = vector.extract_strided_slice %37 {offsets = [0, 28], sizes = [8, 4], strides = [1, 1]} : vector<8x32xf32> to vector<8x4xf32>
    %cst_46 = arith.constant dense<0.000000e+00> : vector<8x8xf32>
    %139 = tpu.matmul %136, %137, %cst_46 {dimension_numbers = #tpu.dot_dimension_numbers<[1], [1], [0], [0], [0, 0, 1, 0], [], []>} : vector<8x4xf32>, vector<8x4xf32>, vector<8x8xf32> -> vector<8x8xf32>
    %cst_47 = arith.constant dense<0xFF800000> : vector<8xf32>
    %140 = vector.multi_reduction <maximumf>, %139, %cst_47 [1] : vector<8x8xf32> to vector<8xf32>
    %141 = vector.shape_cast %140 : vector<8xf32> to vector<8x1xf32>
    %142 = vector.broadcast %141 : vector<8x1xf32> to vector<8x8xf32>
    %143 = arith.subf %139, %142 : vector<8x8xf32>
    %144 = math.exp %143 : vector<8x8xf32>
    %cst_48 = arith.constant dense<0.000000e+00> : vector<8xf32>
    %145 = vector.multi_reduction <add>, %144, %cst_48 [1] : vector<8x8xf32> to vector<8xf32>
    %146 = vector.shape_cast %145 : vector<8xf32> to vector<8x1xf32>
    %147 = vector.broadcast %146 : vector<8x1xf32> to vector<8x8xf32>
    %148 = arith.divf %144, %147 : vector<8x8xf32>
    %cst_49 = arith.constant dense<0.000000e+00> : vector<8x4xf32>
    %149 = tpu.matmul %148, %138, %cst_49 {dimension_numbers = #tpu.dot_dimension_numbers<[1], [0], [0], [1], [0, 0, 1, 1], [], []>} : vector<8x8xf32>, vector<8x4xf32>, vector<8x4xf32> -> vector<8x4xf32>
    %150 = tpu.concatenate %51, %65, %79, %93, %107, %121, %135, %149 in 1 : vector<8x4xf32>, vector<8x4xf32>, vector<8x4xf32>, vector<8x4xf32>, vector<8x4xf32>, vector<8x4xf32>, vector<8x4xf32>, vector<8x4xf32> -> vector<8x32xf32>
    %c0_50 = arith.constant 0 : index
    %c0_51 = arith.constant 0 : index
    %151 = vector.load %arg7[%c0_50, %c0_51] : memref<32x32xf32, #tpu.memory_space<vmem>>, vector<32x32xf32>
    %cst_52 = arith.constant dense<0.000000e+00> : vector<8x32xf32>
    %152 = tpu.matmul %150, %151, %cst_52 {dimension_numbers = #tpu.dot_dimension_numbers<[1], [0], [0], [1], [0, 0, 1, 1], [], []>} : vector<8x32xf32>, vector<32x32xf32>, vector<8x32xf32> -> vector<8x32xf32>
    %c0_53 = arith.constant 0 : index
    %c0_54 = arith.constant 0 : index
    %153 = vector.load %arg8[%c0_53, %c0_54] : memref<1x32xf32, #tpu.memory_space<vmem>>, vector<1x32xf32>
    %154 = vector.broadcast %153 : vector<1x32xf32> to vector<8x32xf32>
    %155 = arith.addf %152, %154 : vector<8x32xf32>
    %156 = arith.addf %155, %27 : vector<8x32xf32>
    %c0_55 = arith.constant 0 : index
    %c0_56 = arith.constant 0 : index
    %157 = vector.load %arg9[%c0_55, %c0_56] : memref<1x32xf32, #tpu.memory_space<vmem>>, vector<1x32xf32>
    %c0_57 = arith.constant 0 : index
    %c0_58 = arith.constant 0 : index
    %158 = vector.load %arg10[%c0_57, %c0_58] : memref<1x32xf32, #tpu.memory_space<vmem>>, vector<1x32xf32>
    %cst_59 = arith.constant dense<0.000000e+00> : vector<8xf32>
    %159 = vector.multi_reduction <add>, %156, %cst_59 [1] : vector<8x32xf32> to vector<8xf32>
    %160 = vector.shape_cast %159 : vector<8xf32> to vector<8x1xf32>
    %cst_60 = arith.constant 3.200000e+01 : f32
    %161 = vector.broadcast %cst_60 : f32 to vector<8x1xf32>
    %162 = arith.divf %160, %161 : vector<8x1xf32>
    %163 = vector.broadcast %162 : vector<8x1xf32> to vector<8x32xf32>
    %164 = arith.subf %156, %163 : vector<8x32xf32>
    %165 = arith.mulf %164, %164 : vector<8x32xf32>
    %cst_61 = arith.constant dense<0.000000e+00> : vector<8xf32>
    %166 = vector.multi_reduction <add>, %165, %cst_61 [1] : vector<8x32xf32> to vector<8xf32>
    %167 = vector.shape_cast %166 : vector<8xf32> to vector<8x1xf32>
    %cst_62 = arith.constant 3.200000e+01 : f32
    %168 = vector.broadcast %cst_62 : f32 to vector<8x1xf32>
    %169 = arith.divf %167, %168 : vector<8x1xf32>
    %170 = vector.broadcast %162 : vector<8x1xf32> to vector<8x32xf32>
    %171 = arith.subf %156, %170 : vector<8x32xf32>
    %cst_63 = arith.constant 9.99999974E-6 : f32
    %172 = vector.broadcast %cst_63 : f32 to vector<8x1xf32>
    %173 = arith.addf %169, %172 : vector<8x1xf32>
    %174 = math.rsqrt %173 : vector<8x1xf32>
    %175 = vector.broadcast %174 : vector<8x1xf32> to vector<8x32xf32>
    %176 = arith.mulf %171, %175 : vector<8x32xf32>
    %177 = vector.broadcast %157 : vector<1x32xf32> to vector<8x32xf32>
    %178 = arith.mulf %176, %177 : vector<8x32xf32>
    %179 = vector.broadcast %158 : vector<1x32xf32> to vector<8x32xf32>
    %180 = arith.addf %178, %179 : vector<8x32xf32>
    %181 = arith.addf %180, %1 : vector<8x32xf32>
    %c0_64 = arith.constant 0 : index
    %c0_65 = arith.constant 0 : index
    %c0_66 = arith.constant 0 : index
    %182 = vector.load %arg11[%c0_64, %c0_65, %c0_66] : memref<1x8x32xf32, #tpu.memory_space<vmem>>, vector<1x8x32xf32>
    %183 = vector.shape_cast %182 : vector<1x8x32xf32> to vector<8x32xf32>
    %184 = vector.shape_cast %181 : vector<8x32xf32> to vector<1x8x32xf32>
    tpu.vector_store %arg11[%c0_64, %c0_65, %c0_66], %184 {strides = array<i32>} : memref<1x8x32xf32, #tpu.memory_space<vmem>>, vector<1x8x32xf32>,
    return
  }
  func.func @transform_0(%arg0: i32) -> (i32, i32, i32) {
    %c0_i32 = arith.constant 0 : i32
    %c0_i32_0 = arith.constant 0 : i32
    %c0_i32_1 = arith.constant 0 : i32
    return %arg0, %c0_i32, %c0_i32_0 : i32, i32, i32
  }
  func.func @transform_1(%arg0: i32) -> (i32, i32) {
    %c0_i32 = arith.constant 0 : i32
    %c0_i32_0 = arith.constant 0 : i32
    %c0_i32_1 = arith.constant 0 : i32
    return %c0_i32, %c0_i32_0 : i32, i32
  }
  func.func @transform_2(%arg0: i32) -> (i32, i32) {
    %c0_i32 = arith.constant 0 : i32
    %c0_i32_0 = arith.constant 0 : i32
    %c0_i32_1 = arith.constant 0 : i32
    return %c0_i32, %c0_i32_0 : i32, i32
  }
  func.func @transform_3(%arg0: i32) -> (i32, i32) {
    %c0_i32 = arith.constant 0 : i32
    %c0_i32_0 = arith.constant 0 : i32
    %c0_i32_1 = arith.constant 0 : i32
    return %c0_i32, %c0_i32_0 : i32, i32
  }
  func.func @transform_4(%arg0: i32) -> (i32, i32) {
    %c0_i32 = arith.constant 0 : i32
    %c0_i32_0 = arith.constant 0 : i32
    %c0_i32_1 = arith.constant 0 : i32
    return %c0_i32, %c0_i32_0 : i32, i32
  }
  func.func @transform_5(%arg0: i32) -> (i32, i32) {
    %c0_i32 = arith.constant 0 : i32
    %c0_i32_0 = arith.constant 0 : i32
    %c0_i32_1 = arith.constant 0 : i32
    return %c0_i32, %c0_i32_0 : i32, i32
  }
  func.func @transform_6(%arg0: i32) -> (i32, i32) {
    %c0_i32 = arith.constant 0 : i32
    %c0_i32_0 = arith.constant 0 : i32
    %c0_i32_1 = arith.constant 0 : i32
    return %c0_i32, %c0_i32_0 : i32, i32
  }
  func.func @transform_7(%arg0: i32) -> (i32, i32) {
    %c0_i32 = arith.constant 0 : i32
    %c0_i32_0 = arith.constant 0 : i32
    %c0_i32_1 = arith.constant 0 : i32
    return %c0_i32, %c0_i32_0 : i32, i32
  }
  func.func @transform_8(%arg0: i32) -> (i32, i32) {
    %c0_i32 = arith.constant 0 : i32
    %c0_i32_0 = arith.constant 0 : i32
    %c0_i32_1 = arith.constant 0 : i32
    return %c0_i32, %c0_i32_0 : i32, i32
  }
  func.func @transform_9(%arg0: i32) -> (i32, i32) {
    %c0_i32 = arith.constant 0 : i32
    %c0_i32_0 = arith.constant 0 : i32
    %c0_i32_1 = arith.constant 0 : i32
    return %c0_i32, %c0_i32_0 : i32, i32
  }
  func.func @transform_10(%arg0: i32) -> (i32, i32, i32) {
    %c0_i32 = arith.constant 0 : i32
    %c0_i32_0 = arith.constant 0 : i32
    %c0_i32_1 = arith.constant 0 : i32
    return %arg0, %c0_i32, %c0_i32_0 : i32, i32, i32
  }
}

</mosaic_0001>

<llo_original>
// kernel: multi_head_self_attention_forward.1
$region0: #{multi_head_self_attention_forward.1}
  #allocation0 [shape = 'u32[]', space=smem, size = 0x4, offset = 0x4, fixed_abs, tag = 'smem constant byte address 0x4 - core index']
  #allocation1 [shape = 'u32[144,128]{1,0:T(1,128)}', space=vmem, size = 0x12000, scoped, tag = 'internal scratch']
  %s0 = inlined_call_operand.vmem [shape: f32[2,8,32], index: 0, kind: input, shape index: {}, may-alias: {0,10}]
  %s1 = inlined_call_operand.vmem [shape: f32[8,32], index: 1, kind: input, shape index: {}]
  %s2 = inlined_call_operand.hbm [shape: f32[1,32], index: 2, kind: input, shape index: {}]
  %s3 = inlined_call_operand.hbm [shape: f32[1,32], index: 3, kind: input, shape index: {}]
  %s4 = inlined_call_operand.hbm [shape: f32[32,96], index: 4, kind: input, shape index: {}]
  %s5 = inlined_call_operand.hbm [shape: f32[1,96], index: 5, kind: input, shape index: {}]
  %s6 = inlined_call_operand.vmem [shape: f32[32,32], index: 6, kind: input, shape index: {}]
  %s7 = inlined_call_operand.hbm [shape: f32[1,32], index: 7, kind: input, shape index: {}]
  %s8 = inlined_call_operand.hbm [shape: f32[1,32], index: 8, kind: input, shape index: {}]
  %s9 = inlined_call_operand.hbm [shape: f32[1,32], index: 9, kind: input, shape index: {}]
  %s10 = inlined_call_operand.vmem [shape: f32[2,8,32], index: 10, kind: output, shape index: {}, may-alias: {0,10}]
  %s11 = sld [smem:[#allocation0]]
  $region101: #{multi_head_self_attention_forward.1} parent=0
    _
  %s13 = ssub.s32 1, %s11
  %s14 = scalar_select 0, %s13, %s11
  $region1: #{multi_head_self_attention_forward.1} parent=0
    #allocation2 [shape = 'u8[512]{0}', space=vmem, size = 0x400, scoped, tag = 'input window, operand 2, single buffered']
    #allocation3 [shape = 's32[2]{0}', space=sflag, size = 0x8, scoped, tag = 'scoped memory for multi_head_self_attention_forward.1']
    #allocation4 [shape = 'u8[512]{0}', space=vmem, size = 0x400, scoped, tag = 'input window, operand 3, single buffered']
    #allocation5 [shape = 's32[1]{0}', space=sflag, size = 0x4, scoped, tag = 'scoped memory for multi_head_self_attention_forward.1']
    #allocation6 [shape = 'u8[16384]{0}', space=vmem, size = 0x4000, scoped, tag = 'input window, operand 4, single buffered']
    #allocation7 [shape = 'u8[512]{0}', space=vmem, size = 0x400, scoped, tag = 'input window, operand 5, single buffered']
    #allocation8 [shape = 's32[1]{0}', space=sflag, size = 0x4, scoped, tag = 'scoped memory for multi_head_self_attention_forward.1']
    #allocation9 [shape = 'u8[512]{0}', space=vmem, size = 0x400, scoped, tag = 'input window, operand 7, single buffered']
    #allocation10 [shape = 'u8[512]{0}', space=vmem, size = 0x400, scoped, tag = 'input window, operand 8, single buffered']
    #allocation11 [shape = 's32[1]{0}', space=sflag, size = 0x4, scoped, tag = 'scoped memory for multi_head_self_attention_forward.1']
    #allocation12 [shape = 'u8[512]{0}', space=vmem, size = 0x400, scoped, tag = 'input window, operand 9, single buffered']
    %15 = vsyncpa [#allocation3], 0
    %16 = vsyncpa [#allocation5], 0
    %17 = vsyncpa [#allocation8], 0
    %18 = vsyncpa [#allocation11], 0
    loop: start=0, step=1, limit=4
    $region2: #{multi_head_self_attention_forward.1} parent=1 // loop_pre_header
      _
    $region3: #{multi_head_self_attention_forward.1} parent=1 // loop_header
      %s20 = sphi 0, %s24
      %p21 = scmp.ge.s32.totalorder %s20, 4
      %s30 = sphi 0, %s32
      %s33 = sphi 0, %s30
      %s34 = sphi 0, %s33
      %s50 = sphi 0, %s34
      %s54 = sphi 0, %s54
      %s56 = sphi 0, %s54
      %s57 = sphi 0, %s56
      %s71 = sphi 0, %s57
      %s75 = sphi 0, %s75
      %s77 = sphi 0, %s75
      %s78 = sphi 0, %s77
      %s92 = sphi 0, %s78
      %s96 = sphi 0, %s96
      %s98 = sphi 0, %s96
      %s99 = sphi 0, %s98
      %s113 = sphi 0, %s99
      %s117 = sphi 0, %s117
      %s119 = sphi 0, %s117
      %s120 = sphi 0, %s119
      %s134 = sphi 0, %s120
      %s138 = sphi 0, %s138
      %s140 = sphi 0, %s138
      %s141 = sphi 0, %s140
      %s155 = sphi 0, %s141
      %s159 = sphi 0, %s159
      %s161 = sphi 0, %s159
      %s162 = sphi 0, %s161
      %s176 = sphi 0, %s162
      %s180 = sphi 0, %s180
      %s182 = sphi 0, %s180
      %s183 = sphi 0, %s182
      %s197 = sphi 0, %s183
      %s201 = sphi 0, %s201
      %s203 = sphi 0, %s201
      %s204 = sphi 0, %s203
      %s218 = sphi 0, %s204
      %s222 = sphi 0, %s222
      %s224 = sphi 0, %s222
      %s225 = sphi 0, %s224
      %s239 = sphi 0, %s225
      %s245 = sphi 0, %s247
      %s248 = sphi 0, %s245
      %s249 = sphi 0, %s248
      %s265 = sphi 0, %s249
    $region4: #{multi_head_self_attention_forward.1} parent=1 // loop_header_branch
      %23 = sbr.rel (%p21) target = $region8
    $region5: #{multi_head_self_attention_forward.1} parent=1 // loop_body
      %s25 = ssub.s32 %s20, 1
      %s26 = ssub.s32 %s20, 2
      %s27 = sadd.s32 %s20, 1
      %s28 = ssub.s32 %s20, %s27
      %p29 = scmp.eq.s32.totalorder %s28, 0
      %s31 = sadd.s32 %s30, 1
      %s32 = scalar_select %p29, %s30, %s31
      %p35 = pneg %p29
      %p36 = scmp.eq.s32.totalorder %s20, 1
      %p37 = por %p35, %p36
      %p38 = scmp.ne.s32.totalorder %s30, %s33
      %p39 = scmp.eq.s32.totalorder %s20, 0
      %p40 = por %p38, %p39
      %p41 = scmp.ne.s32.totalorder %s30, %s33
      %p42 = scmp.eq.s32.totalorder %s25, 1
      %p43 = por %p41, %p42
      %p44 = scmp.ne.s32.totalorder %s33, %s34
      %p45 = scmp.eq.s32.totalorder %s25, 0
      %p46 = por %p44, %p45
      %p47 = scmp.ne.s32.totalorder %s33, %s34
      %p48 = scmp.eq.s32.totalorder %s26, 1
      %p49 = por %p47, %p48
      %p51 = scmp.ne.s32.totalorder %s34, %s50
      %p52 = scmp.eq.s32.totalorder %s26, 0
      %p53 = por %p51, %p52
      %s55 = sadd.s32 %s54, 1
      %p58 = scmp.eq.s32.totalorder %s20, 1
      %p59 = scmp.ne.s32.totalorder %s54, %s56
      %p60 = scmp.eq.s32.totalorder %s20, 0
      %p61 = por %p59, %p60
      %p62 = scmp.ne.s32.totalorder %s54, %s56
      %p63 = scmp.eq.s32.totalorder %s25, 1
      %p64 = por %p62, %p63
      %p65 = scmp.ne.s32.totalorder %s56, %s57
      %p66 = scmp.eq.s32.totalorder %s25, 0
      %p67 = por %p65, %p66
      %p68 = scmp.ne.s32.totalorder %s56, %s57
      %p69 = scmp.eq.s32.totalorder %s26, 1
      %p70 = por %p68, %p69
      %p72 = scmp.ne.s32.totalorder %s57, %s71
      %p73 = scmp.eq.s32.totalorder %s26, 0
      %p74 = por %p72, %p73
      %s76 = sadd.s32 %s75, 1
      %p79 = scmp.eq.s32.totalorder %s20, 1
      %p80 = scmp.ne.s32.totalorder %s75, %s77
      %p81 = scmp.eq.s32.totalorder %s20, 0
      %p82 = por %p80, %p81
      %p83 = scmp.ne.s32.totalorder %s75, %s77
      %p84 = scmp.eq.s32.totalorder %s25, 1
      %p85 = por %p83, %p84
      %p86 = scmp.ne.s32.totalorder %s77, %s78
      %p87 = scmp.eq.s32.totalorder %s25, 0
      %p88 = por %p86, %p87
      %p89 = scmp.ne.s32.totalorder %s77, %s78
      %p90 = scmp.eq.s32.totalorder %s26, 1
      %p91 = por %p89, %p90
      %p93 = scmp.ne.s32.totalorder %s78, %s92
      %p94 = scmp.eq.s32.totalorder %s26, 0
      %p95 = por %p93, %p94
      %s97 = sadd.s32 %s96, 1
      %p100 = scmp.eq.s32.totalorder %s20, 1
      %p101 = scmp.ne.s32.totalorder %s96, %s98
      %p102 = scmp.eq.s32.totalorder %s20, 0
      %p103 = por %p101, %p102
      %p104 = scmp.ne.s32.totalorder %s96, %s98
      %p105 = scmp.eq.s32.totalorder %s25, 1
      %p106 = por %p104, %p105
      %p107 = scmp.ne.s32.totalorder %s98, %s99
      %p108 = scmp.eq.s32.totalorder %s25, 0
      %p109 = por %p107, %p108
      %p110 = scmp.ne.s32.totalorder %s98, %s99
      %p111 = scmp.eq.s32.totalorder %s26, 1
      %p112 = por %p110, %p111
      %p114 = scmp.ne.s32.totalorder %s99, %s113
      %p115 = scmp.eq.s32.totalorder %s26, 0
      %p116 = por %p114, %p115
      %s118 = sadd.s32 %s117, 1
      %p121 = scmp.eq.s32.totalorder %s20, 1
      %p122 = scmp.ne.s32.totalorder %s117, %s119
      %p123 = scmp.eq.s32.totalorder %s20, 0
      %p124 = por %p122, %p123
      %p125 = scmp.ne.s32.totalorder %s117, %s119
      %p126 = scmp.eq.s32.totalorder %s25, 1
      %p127 = por %p125, %p126
      %p128 = scmp.ne.s32.totalorder %s119, %s120
      %p129 = scmp.eq.s32.totalorder %s25, 0
      %p130 = por %p128, %p129
      %p131 = scmp.ne.s32.totalorder %s119, %s120
      %p132 = scmp.eq.s32.totalorder %s26, 1
      %p133 = por %p131, %p132
      %p135 = scmp.ne.s32.totalorder %s120, %s134
      %p136 = scmp.eq.s32.totalorder %s26, 0
      %p137 = por %p135, %p136
      %s139 = sadd.s32 %s138, 1
      %p142 = scmp.eq.s32.totalorder %s20, 1
      %p143 = scmp.ne.s32.totalorder %s138, %s140
      %p144 = scmp.eq.s32.totalorder %s20, 0
      %p145 = por %p143, %p144
      %p146 = scmp.ne.s32.totalorder %s138, %s140
      %p147 = scmp.eq.s32.totalorder %s25, 1
      %p148 = por %p146, %p147
      %p149 = scmp.ne.s32.totalorder %s140, %s141
      %p150 = scmp.eq.s32.totalorder %s25, 0
      %p151 = por %p149, %p150
      %p152 = scmp.ne.s32.totalorder %s140, %s141
      %p153 = scmp.eq.s32.totalorder %s26, 1
      %p154 = por %p152, %p153
      %p156 = scmp.ne.s32.totalorder %s141, %s155
      %p157 = scmp.eq.s32.totalorder %s26, 0
      %p158 = por %p156, %p157
      %s160 = sadd.s32 %s159, 1
      %p163 = scmp.eq.s32.totalorder %s20, 1
      %p164 = scmp.ne.s32.totalorder %s159, %s161
      %p165 = scmp.eq.s32.totalorder %s20, 0
      %p166 = por %p164, %p165
      %p167 = scmp.ne.s32.totalorder %s159, %s161
      %p168 = scmp.eq.s32.totalorder %s25, 1
      %p169 = por %p167, %p168
      %p170 = scmp.ne.s32.totalorder %s161, %s162
      %p171 = scmp.eq.s32.totalorder %s25, 0
      %p172 = por %p170, %p171
      %p173 = scmp.ne.s32.totalorder %s161, %s162
      %p174 = scmp.eq.s32.totalorder %s26, 1
      %p175 = por %p173, %p174
      %p177 = scmp.ne.s32.totalorder %s162, %s176
      %p178 = scmp.eq.s32.totalorder %s26, 0
      %p179 = por %p177, %p178
      %s181 = sadd.s32 %s180, 1
      %p184 = scmp.eq.s32.totalorder %s20, 1
      %p185 = scmp.ne.s32.totalorder %s180, %s182
      %p186 = scmp.eq.s32.totalorder %s20, 0
      %p187 = por %p185, %p186
      %p188 = scmp.ne.s32.totalorder %s180, %s182
      %p189 = scmp.eq.s32.totalorder %s25, 1
      %p190 = por %p188, %p189
      %p191 = scmp.ne.s32.totalorder %s182, %s183
      %p192 = scmp.eq.s32.totalorder %s25, 0
      %p193 = por %p191, %p192
      %p194 = scmp.ne.s32.totalorder %s182, %s183
      %p195 = scmp.eq.s32.totalorder %s26, 1
      %p196 = por %p194, %p195
      %p198 = scmp.ne.s32.totalorder %s183, %s197
      %p199 = scmp.eq.s32.totalorder %s26, 0
      %p200 = por %p198, %p199
      %s202 = sadd.s32 %s201, 1
      %p205 = scmp.eq.s32.totalorder %s20, 1
      %p206 = scmp.ne.s32.totalorder %s201, %s203
      %p207 = scmp.eq.s32.totalorder %s20, 0
      %p208 = por %p206, %p207
      %p209 = scmp.ne.s32.totalorder %s201, %s203
      %p210 = scmp.eq.s32.totalorder %s25, 1
      %p211 = por %p209, %p210
      %p212 = scmp.ne.s32.totalorder %s203, %s204
      %p213 = scmp.eq.s32.totalorder %s25, 0
      %p214 = por %p212, %p213
      %p215 = scmp.ne.s32.totalorder %s203, %s204
      %p216 = scmp.eq.s32.totalorder %s26, 1
      %p217 = por %p215, %p216
      %p219 = scmp.ne.s32.totalorder %s204, %s218
      %p220 = scmp.eq.s32.totalorder %s26, 0
      %p221 = por %p219, %p220
      %s223 = sadd.s32 %s222, 1
      %p226 = scmp.eq.s32.totalorder %s20, 1
      %p227 = scmp.ne.s32.totalorder %s222, %s224
      %p228 = scmp.eq.s32.totalorder %s20, 0
      %p229 = por %p227, %p228
      %p230 = scmp.ne.s32.totalorder %s222, %s224
      %p231 = scmp.eq.s32.totalorder %s25, 1
      %p232 = por %p230, %p231
      %p233 = scmp.ne.s32.totalorder %s224, %s225
      %p234 = scmp.eq.s32.totalorder %s25, 0
      %p235 = por %p233, %p234
      %p236 = scmp.ne.s32.totalorder %s224, %s225
      %p237 = scmp.eq.s32.totalorder %s26, 1
      %p238 = por %p236, %p237
      %p240 = scmp.ne.s32.totalorder %s225, %s239
      %p241 = scmp.eq.s32.totalorder %s26, 0
      %p242 = por %p240, %p241
      %s243 = ssub.s32 %s20, %s27
      %p244 = scmp.eq.s32.totalorder %s243, 0
      %s246 = sadd.s32 %s245, 1
      %s247 = scalar_select %p244, %s245, %s246
      %p250 = pneg %p244
      %p251 = scmp.eq.s32.totalorder %s20, 1
      %p252 = por %p250, %p251
      %p253 = scmp.ne.s32.totalorder %s245, %s248
      %p254 = scmp.eq.s32.totalorder %s20, 0
      %p255 = por %p253, %p254
      %p256 = scmp.ne.s32.totalorder %s245, %s248
      %p257 = scmp.eq.s32.totalorder %s25, 1
      %p258 = por %p256, %p257
      %p259 = scmp.ne.s32.totalorder %s248, %s249
      %p260 = scmp.eq.s32.totalorder %s25, 0
      %p261 = por %p259, %p260
      %p262 = scmp.ne.s32.totalorder %s248, %s249
      %p263 = scmp.eq.s32.totalorder %s26, 1
      %p264 = por %p262, %p263
      %p266 = scmp.ne.s32.totalorder %s249, %s265
      %p267 = scmp.eq.s32.totalorder %s26, 0
      %p268 = por %p266, %p267
      %p269 = scmp.le.s32.totalorder 1, %s20
      %p270 = scmp.lt.s32.totalorder %s20, 3
      %p271 = pnand %p269, %p270
      %p272 = pneg %p271
      // Predicated region
      $region9: #{multi_head_self_attention_forward.1} parent=5 // pred_check
        _
      $region10: #{multi_head_self_attention_forward.1} parent=5 // pred_check_branch
        %274 = sbr.rel (%p271) target = $region12
      $region11: #{multi_head_self_attention_forward.1} parent=5 // pred_region
        %s275 = ssub.s32 %s20, 1
        // Predicated region
        $region13: #{multi_head_self_attention_forward.1} parent=11 // pred_check
          %p276 = pneg %p67
        $region14: #{multi_head_self_attention_forward.1} parent=11 // pred_check_branch
          %278 = sbr.rel (%p276) target = $region16
        $region15: #{multi_head_self_attention_forward.1} parent=11 // pred_region
          _
        $region16: #{multi_head_self_attention_forward.1} parent=11 // pred_fallthru
          _
        // Predicated region
        $region17: #{multi_head_self_attention_forward.1} parent=11 // pred_check
          %p279 = pneg %p88
        $region18: #{multi_head_self_attention_forward.1} parent=11 // pred_check_branch
          %281 = sbr.rel (%p279) target = $region20
        $region19: #{multi_head_self_attention_forward.1} parent=11 // pred_region
          %s283 = ssub.s32 16, 16
          %284 = vsyncadd [#allocation3], %s283
          %s286 = sshll.u32 [#allocation2], 4
          %s287 = int_to_ptr.vmem [resolvable:$true] %s286
          %289 = dma.hbm_to_vmem [thread:$0]  %s2, 16, %s287, [#allocation3]
        $region20: #{multi_head_self_attention_forward.1} parent=11 // pred_fallthru
          _
        // Predicated region
        $region21: #{multi_head_self_attention_forward.1} parent=11 // pred_check
          %p290 = pneg %p109
        $region22: #{multi_head_self_attention_forward.1} parent=11 // pred_check_branch
          %292 = sbr.rel (%p290) target = $region24
        $region23: #{multi_head_self_attention_forward.1} parent=11 // pred_region
          %s294 = ssub.s32 16, 16
          %295 = vsyncadd [#allocation5], %s294
          %s297 = sshll.u32 [#allocation4], 4
          %s298 = int_to_ptr.vmem [resolvable:$true] %s297
          %300 = dma.hbm_to_vmem [thread:$0]  %s3, 16, %s298, [#allocation5]
        $region24: #{multi_head_self_attention_forward.1} parent=11 // pred_fallthru
          _
        // Predicated region
        $region25: #{multi_head_self_attention_forward.1} parent=11 // pred_check
          %p301 = pneg %p130
        $region26: #{multi_head_self_attention_forward.1} parent=11 // pred_check_branch
          %303 = sbr.rel (%p301) target = $region28
        $region27: #{multi_head_self_attention_forward.1} parent=11 // pred_region
          %s305 = ssub.s32 512, 512
          %306 = vsyncadd [#allocation5], %s305
          %s307 = sshll.u32 [#allocation6], 4
          %s308 = int_to_ptr.vmem [resolvable:$true] %s307
          %313 = dma.hbm_to_vmem [thread:$0]  %s4, 512, %s308, [#allocation5], 128, 128, 8
        $region28: #{multi_head_self_attention_forward.1} parent=11 // pred_fallthru
          _
        // Predicated region
        $region29: #{multi_head_self_attention_forward.1} parent=11 // pred_check
          %p314 = pneg %p151
        $region30: #{multi_head_self_attention_forward.1} parent=11 // pred_check_branch
          %316 = sbr.rel (%p314) target = $region32
        $region31: #{multi_head_self_attention_forward.1} parent=11 // pred_region
          %s318 = ssub.s32 16, 16
          %319 = vsyncadd [#allocation8], %s318
          %s321 = sshll.u32 [#allocation7], 4
          %s322 = int_to_ptr.vmem [resolvable:$true] %s321
          %324 = dma.hbm_to_vmem [thread:$0]  %s5, 16, %s322, [#allocation8]
        $region32: #{multi_head_self_attention_forward.1} parent=11 // pred_fallthru
          _
        // Predicated region
        $region33: #{multi_head_self_attention_forward.1} parent=11 // pred_check
          %p325 = pneg %p172
        $region34: #{multi_head_self_attention_forward.1} parent=11 // pred_check_branch
          %327 = sbr.rel (%p325) target = $region36
        $region35: #{multi_head_self_attention_forward.1} parent=11 // pred_region
          _
        $region36: #{multi_head_self_attention_forward.1} parent=11 // pred_fallthru
          _
        // Predicated region
        $region37: #{multi_head_self_attention_forward.1} parent=11 // pred_check
          %p328 = pneg %p193
        $region38: #{multi_head_self_attention_forward.1} parent=11 // pred_check_branch
          %330 = sbr.rel (%p328) target = $region40
        $region39: #{multi_head_self_attention_forward.1} parent=11 // pred_region
          %s332 = ssub.s32 16, 16
          %333 = vsyncadd [#allocation8], %s332
          %s335 = sshll.u32 [#allocation9], 4
          %s336 = int_to_ptr.vmem [resolvable:$true] %s335
          %338 = dma.hbm_to_vmem [thread:$0]  %s7, 16, %s336, [#allocation8]
        $region40: #{multi_head_self_attention_forward.1} parent=11 // pred_fallthru
          _
        // Predicated region
        $region41: #{multi_head_self_attention_forward.1} parent=11 // pred_check
          %p339 = pneg %p214
        $region42: #{multi_head_self_attention_forward.1} parent=11 // pred_check_branch
          %341 = sbr.rel (%p339) target = $region44
        $region43: #{multi_head_self_attention_forward.1} parent=11 // pred_region
          %s343 = ssub.s32 16, 16
          %344 = vsyncadd [#allocation11], %s343
          %s346 = sshll.u32 [#allocation10], 4
          %s347 = int_to_ptr.vmem [resolvable:$true] %s346
          %349 = dma.hbm_to_vmem [thread:$0]  %s8, 16, %s347, [#allocation11]
        $region44: #{multi_head_self_attention_forward.1} parent=11 // pred_fallthru
          _
        // Predicated region
        $region45: #{multi_head_self_attention_forward.1} parent=11 // pred_check
          %p350 = pneg %p235
        $region46: #{multi_head_self_attention_forward.1} parent=11 // pred_check_branch
          %352 = sbr.rel (%p350) target = $region48
        $region47: #{multi_head_self_attention_forward.1} parent=11 // pred_region
          %s354 = ssub.s32 16, 16
          %355 = vsyncadd [#allocation11], %s354
          %s357 = sshll.u32 [#allocation12], 4
          %s358 = int_to_ptr.vmem [resolvable:$true] %s357
          %360 = dma.hbm_to_vmem [thread:$0]  %s9, 16, %s358, [#allocation11]
        $region48: #{multi_head_self_attention_forward.1} parent=11 // pred_fallthru
          _
      $region12: #{multi_head_self_attention_forward.1} parent=5 // pred_fallthru
        _
      %p361 = scmp.lt.s32.totalorder %s20, 2
      // Predicated region
      $region49: #{multi_head_self_attention_forward.1} parent=5 // pred_check
        %p362 = pneg %p361
      $region50: #{multi_head_self_attention_forward.1} parent=5 // pred_check_branch
        %364 = sbr.rel (%p362) target = $region52
      $region51: #{multi_head_self_attention_forward.1} parent=5 // pred_region
        // Predicated region
        $region53: #{multi_head_self_attention_forward.1} parent=51 // pred_check
          %p365 = pneg %p40
        $region54: #{multi_head_self_attention_forward.1} parent=51 // pred_check_branch
          %367 = sbr.rel (%p365) target = $region56
        $region55: #{multi_head_self_attention_forward.1} parent=51 // pred_region
          %p368 = scmp.lt.s32.totalorder %s20, 1
          %s369 = scalar_select %p368, %s20, 1
          %s370 = smul.addr %s369, 8
          %s371 = scalar_lea.vmem %s0, %s370
        $region56: #{multi_head_self_attention_forward.1} parent=51 // pred_fallthru
          _
      $region52: #{multi_head_self_attention_forward.1} parent=5 // pred_fallthru
        _
      %p372 = scmp.le.s32.totalorder 1, %s20
      %p373 = scmp.lt.s32.totalorder %s20, 3
      %p374 = pnand %p372, %p373
      %p375 = pneg %p374
      // Predicated region
      $region57: #{multi_head_self_attention_forward.1} parent=5 // pred_check
        _
      $region58: #{multi_head_self_attention_forward.1} parent=5 // pred_check_branch
        %377 = sbr.rel (%p374) target = $region60
      $region59: #{multi_head_self_attention_forward.1} parent=5 // pred_region
        %s378 = ssub.s32 %s20, 1
        // Predicated region
        $region61: #{multi_head_self_attention_forward.1} parent=59 // pred_check
          %p379 = pneg %p88
        $region62: #{multi_head_self_attention_forward.1} parent=59 // pred_check_branch
          %381 = sbr.rel (%p379) target = $region64
        $region63: #{multi_head_self_attention_forward.1} parent=59 // pred_region
          %382 = dma.done [#allocation3], 16
        $region64: #{multi_head_self_attention_forward.1} parent=59 // pred_fallthru
          _
        // Predicated region
        $region65: #{multi_head_self_attention_forward.1} parent=59 // pred_check
          %p383 = pneg %p109
        $region66: #{multi_head_self_attention_forward.1} parent=59 // pred_check_branch
          %385 = sbr.rel (%p383) target = $region68
        $region67: #{multi_head_self_attention_forward.1} parent=59 // pred_region
          %386 = dma.done [#allocation5], 16
        $region68: #{multi_head_self_attention_forward.1} parent=59 // pred_fallthru
          _
        // Predicated region
        $region69: #{multi_head_self_attention_forward.1} parent=59 // pred_check
          %p387 = pneg %p130
        $region70: #{multi_head_self_attention_forward.1} parent=59 // pred_check_branch
          %389 = sbr.rel (%p387) target = $region72
        $region71: #{multi_head_self_attention_forward.1} parent=59 // pred_region
          %390 = dma.done [#allocation5], 512
        $region72: #{multi_head_self_attention_forward.1} parent=59 // pred_fallthru
          _
        // Predicated region
        $region73: #{multi_head_self_attention_forward.1} parent=59 // pred_check
          %p391 = pneg %p151
        $region74: #{multi_head_self_attention_forward.1} parent=59 // pred_check_branch
          %393 = sbr.rel (%p391) target = $region76
        $region75: #{multi_head_self_attention_forward.1} parent=59 // pred_region
          %394 = dma.done [#allocation8], 16
        $region76: #{multi_head_self_attention_forward.1} parent=59 // pred_fallthru
          _
        // Predicated region
        $region77: #{multi_head_self_attention_forward.1} parent=59 // pred_check
          %p395 = pneg %p193
        $region78: #{multi_head_self_attention_forward.1} parent=59 // pred_check_branch
          %397 = sbr.rel (%p395) target = $region80
        $region79: #{multi_head_self_attention_forward.1} parent=59 // pred_region
          %398 = dma.done [#allocation8], 16
        $region80: #{multi_head_self_attention_forward.1} parent=59 // pred_fallthru
          _
        // Predicated region
        $region81: #{multi_head_self_attention_forward.1} parent=59 // pred_check
          %p399 = pneg %p214
        $region82: #{multi_head_self_attention_forward.1} parent=59 // pred_check_branch
          %401 = sbr.rel (%p399) target = $region84
        $region83: #{multi_head_self_attention_forward.1} parent=59 // pred_region
          %402 = dma.done [#allocation11], 16
        $region84: #{multi_head_self_attention_forward.1} parent=59 // pred_fallthru
          _
        // Predicated region
        $region85: #{multi_head_self_attention_forward.1} parent=59 // pred_check
          %p403 = pneg %p235
        $region86: #{multi_head_self_attention_forward.1} parent=59 // pred_check_branch
          %405 = sbr.rel (%p403) target = $region88
        $region87: #{multi_head_self_attention_forward.1} parent=59 // pred_region
          %406 = dma.done [#allocation11], 16
        $region88: #{multi_head_self_attention_forward.1} parent=59 // pred_fallthru
          _
        %p407 = scmp.lt.s32.totalorder %s25, 1
        %s408 = scalar_select %p407, %s25, 1
        %s409 = smul.addr %s408, 8
        %s410 = scalar_lea.vmem %s0, %s409
        %p411 = pneg %p46
        %p412 = pneg %p43
        %p413 = pneg %p67
        %p414 = pneg %p64
        %p415 = pneg %p88
        %p416 = pneg %p85
        %p417 = pneg %p109
        %p418 = pneg %p106
        %p419 = pneg %p130
        %p420 = pneg %p127
        %p421 = pneg %p151
        %p422 = pneg %p148
        %p423 = pneg %p172
        %p424 = pneg %p169
        %p425 = pneg %p193
        %p426 = pneg %p190
        %p427 = pneg %p214
        %p428 = pneg %p211
        %p429 = pneg %p235
        %p430 = pneg %p232
        %p431 = pneg %p261
        %p432 = pneg %p258
        %p433 = scmp.lt.s32.totalorder %s25, 1
        %s434 = scalar_select %p433, %s25, 1
        %s435 = smul.addr %s434, 8
        %s436 = scalar_lea.vmem %s10, %s435
        %p437 = scmp.lt.s32.totalorder %s25, 1
        %s438 = scalar_select %p437, %s25, 1
        %s439 = smul.addr %s438, 8
        %s440 = scalar_lea.vmem %s0, %s439
        %p441 = scmp.lt.s32.totalorder %s25, 1
        %s442 = scalar_select %p441, %s25, 1
        %s443 = smul.addr %s442, 8
        %s444 = scalar_lea.vmem %s10, %s443
        %v445 = vld [vmem:[%s440] sm:$0xff]
        %v446 = vld [vmem:[#allocation2] sm:$0x1]
        %v447 = vld [vmem:[#allocation4] sm:$0x1]
        %vm448 = vcmask 261120
        %v449 = vsel %vm448, %v445, 0.0
        %450 = vadd.xlane.f32.xlu0 %v449
        %v451 = vpop.xlane.xlu0 %450
        %v452 = vrcp.pop 32.0
        %v453 = vmul.f32 %v451, %v452
        %v454 = vsub.f32 %v445, %v453
        %v455 = vmul.f32 %v454, %v454
        %v456 = vsel %vm448, %v455, 0.0
        %457 = vadd.xlane.f32.xlu0 %v456
        %v458 = vpop.xlane.xlu0 %457
        %v459 = vmul.f32 %v458, %v452
        %v460 = vadd.f32 %v459, 1e-05
        %v461 = vrsqrt.pop %v460
        %v462 = vmul.f32 %v454, %v461
        %v464 = vlaneseq
        %v465 = vshrl.u32 %v464, 7
        %v466 = vsub.s32 0, %v465
        %v467 = vrot.slane %v446, %v466
        %v469 = vmul.f32 %v462, %v467
        %v471 = vlaneseq
        %v472 = vshrl.u32 %v471, 7
        %v473 = vsub.s32 0, %v472
        %v474 = vrot.slane %v447, %v473
        %v476 = vadd.f32 %v469, %v474
        %v477 = vld [vmem:[%s1] sm:$0xff]
        %v478 = vadd.f32 %v476, %v477
        %v479 = vld [vmem:[#allocation6] sm:$0xff]
        %v480 = vld [vmem:[#allocation6 + $0x8] sm:$0xff]
        %v481 = vld [vmem:[#allocation6 + $0x10] sm:$0xff]
        %v482 = vld [vmem:[#allocation6 + $0x18] sm:$0xff]
        %v483 = vld [vmem:[#allocation7] sm:$0x1]
        %v485 = vlaneseq
        %v486 = vshrl.u32 %v485, 7
        %v487 = vsub.s32 0, %v486
        %v488 = vrot.slane %v483, %v487
        %v491 = vsel %vm448, %v478, 0
        %493 = vmatprep.subr.mxu0 0.0
        %494 = vmatpush1.msra.mxu0 %v479
        %495 = vmatprep.subr.mxu0 0.0
        %496 = vmatpush1.msra.mxu0 %v480
        %497 = vmatprep.subr.mxu0 0.0
        %498 = vmatpush1.msra.mxu0 %v481
        %499 = vmatprep.subr.mxu0 0.0
        %500 = vmatpush1.msra.mxu0 %v482
        %501 = vmatprep.subr.mxu0 0.0
        %502 = vmatpush1.msra.mxu0 0.0
        %503 = vmatprep.subr.mxu0 0.0
        %504 = vmatpush1.msra.mxu0 0.0
        %505 = vmatprep.subr.mxu0 0.0
        %506 = vmatpush1.msra.mxu0 0.0
        %507 = vmatprep.subr.mxu0 0.0
        %508 = vmatpush1.msra.mxu0 0.0
        %509 = vmatprep.subr.mxu0 0.0
        %510 = vmatpush1.msra.mxu0 0.0
        %511 = vmatprep.subr.mxu0 0.0
        %512 = vmatpush1.msra.mxu0 0.0
        %513 = vmatprep.subr.mxu0 0.0
        %514 = vmatpush1.msra.mxu0 0.0
        %515 = vmatprep.subr.mxu0 0.0
        %516 = vmatpush1.msra.mxu0 0.0
        %517 = vmatprep.subr.mxu0 0.0
        %518 = vmatpush1.msra.mxu0 0.0
        %519 = vmatprep.subr.mxu0 0.0
        %520 = vmatpush1.msra.mxu0 0.0
        %521 = vmatprep.subr.mxu0 0.0
        %522 = vmatpush1.msra.mxu0 0.0
        %523 = vmatprep.subr.mxu0 0.0
        %524 = vmatpush1.msra.mxu0 0.0
        %525 = vmatprep.subr.mxu0 0.0
        %526 = vmatpush1.msra.mxu0 0.0
        %527 = vmatprep.subr.mxu0 0.0
        %528 = vmatpush1.msra.mxu0 0.0
        %529 = vmatprep.subr.mxu0 0.0
        %530 = vmatpush1.msra.mxu0 0.0
        %531 = vmatprep.subr.mxu0 0.0
        %532 = vmatpush1.msra.mxu0 0.0
        %533 = vmatprep.subr.mxu0 0.0
        %534 = vmatpush1.msra.mxu0 0.0
        %535 = vmatprep.subr.mxu0 0.0
        %536 = vmatpush1.msra.mxu0 0.0
        %537 = vmatprep.subr.mxu0 0.0
        %538 = vmatpush1.msra.mxu0 0.0
        %539 = vmatprep.subr.mxu0 0.0
        %540 = vmatpush1.msra.mxu0 0.0
        %541 = vmatprep.subr.mxu0 0.0
        %542 = vmatpush1.msra.mxu0 0.0
        %543 = vmatprep.subr.mxu0 0.0
        %544 = vmatpush1.msra.mxu0 0.0
        %545 = vmatprep.subr.mxu0 0.0
        %546 = vmatpush1.msra.mxu0 0.0
        %547 = vmatprep.subr.mxu0 0.0
        %548 = vmatpush1.msra.mxu0 0.0
        %549 = vmatprep.subr.mxu0 0.0
        %550 = vmatpush1.msra.mxu0 0.0
        %551 = vmatprep.subr.mxu0 0.0
        %552 = vmatpush1.msra.mxu0 0.0
        %553 = vmatprep.subr.mxu0 0.0
        %554 = vmatpush1.msra.mxu0 0.0
        %555 = vmatprep.subr.mxu0 0.0
        %556 = vmatpush1.msra.mxu0 0.0
        %557 = vmatprep.mubr.f32.mxu0 0.0
        %558 = vmatmul.mubr.f32.gmra.mrb[0].mxu0 %v491
        %v559 = vpop.f32.mrb[0].mxu0
        %v560 = vadd.f32 %v488, %v559
        %v561 = vpop.f32.mrb[0].mxu0
        %562 = vdwg.mxu0
        %v563 = vmul.f32 %v560, 0.5
        %565 = vrot.lane.b32.xlu0 %v560, 96
        %v566 = vpop.permute.xlu0 %565
        %vm567 = vcmask 31744
        %v569 = vsel %vm567, %v563, 0
        %v571 = vsel %vm567, %v566, 0
        %573 = vmatprep.subr.mxu0 0.0
        %574 = vmatpush1.xpose.msra.mxu0 %v571
        %575 = vmatprep.subr.mxu0 0.0
        %576 = vmatpush1.xpose.msra.mxu0 0.0
        %577 = vmatprep.subr.mxu0 0.0
        %578 = vmatpush1.xpose.msra.mxu0 0.0
        %579 = vmatprep.subr.mxu0 0.0
        %580 = vmatpush1.xpose.msra.mxu0 0.0
        %581 = vmatprep.subr.mxu0 0.0
        %582 = vmatpush1.xpose.msra.mxu0 0.0
        %583 = vmatprep.subr.mxu0 0.0
        %584 = vmatpush1.xpose.msra.mxu0 0.0
        %585 = vmatprep.subr.mxu0 0.0
        %586 = vmatpush1.xpose.msra.mxu0 0.0
        %587 = vmatprep.subr.mxu0 0.0
        %588 = vmatpush1.xpose.msra.mxu0 0.0
        %589 = vmatprep.subr.mxu0 0.0
        %590 = vmatpush1.xpose.msra.mxu0 0.0
        %591 = vmatprep.subr.mxu0 0.0
        %592 = vmatpush1.xpose.msra.mxu0 0.0
        %593 = vmatprep.subr.mxu0 0.0
        %594 = vmatpush1.xpose.msra.mxu0 0.0
        %595 = vmatprep.subr.mxu0 0.0
        %596 = vmatpush1.xpose.msra.mxu0 0.0
        %597 = vmatprep.subr.mxu0 0.0
        %598 = vmatpush1.xpose.msra.mxu0 0.0
        %599 = vmatprep.subr.mxu0 0.0
        %600 = vmatpush1.xpose.msra.mxu0 0.0
        %601 = vmatprep.subr.mxu0 0.0
        %602 = vmatpush1.xpose.msra.mxu0 0.0
        %603 = vmatprep.subr.mxu0 0.0
        %604 = vmatpush1.xpose.msra.mxu0 0.0
        %605 = vmatprep.subr.mxu0 0.0
        %606 = vmatpush1.xpose.msra.mxu0 0.0
        %607 = vmatprep.subr.mxu0 0.0
        %608 = vmatpush1.xpose.msra.mxu0 0.0
        %609 = vmatprep.subr.mxu0 0.0
        %610 = vmatpush1.xpose.msra.mxu0 0.0
        %611 = vmatprep.subr.mxu0 0.0
        %612 = vmatpush1.xpose.msra.mxu0 0.0
        %613 = vmatprep.subr.mxu0 0.0
        %614 = vmatpush1.xpose.msra.mxu0 0.0
        %615 = vmatprep.subr.mxu0 0.0
        %616 = vmatpush1.xpose.msra.mxu0 0.0
        %617 = vmatprep.subr.mxu0 0.0
        %618 = vmatpush1.xpose.msra.mxu0 0.0
        %619 = vmatprep.subr.mxu0 0.0
        %620 = vmatpush1.xpose.msra.mxu0 0.0
        %621 = vmatprep.subr.mxu0 0.0
        %622 = vmatpush1.xpose.msra.mxu0 0.0
        %623 = vmatprep.subr.mxu0 0.0
        %624 = vmatpush1.xpose.msra.mxu0 0.0
        %625 = vmatprep.subr.mxu0 0.0
        %626 = vmatpush1.xpose.msra.mxu0 0.0
        %627 = vmatprep.subr.mxu0 0.0
        %628 = vmatpush1.xpose.msra.mxu0 0.0
        %629 = vmatprep.subr.mxu0 0.0
        %630 = vmatpush1.xpose.msra.mxu0 0.0
        %631 = vmatprep.subr.mxu0 0.0
        %632 = vmatpush1.xpose.msra.mxu0 0.0
        %633 = vmatprep.subr.mxu0 0.0
        %634 = vmatpush1.xpose.msra.mxu0 0.0
        %635 = vmatprep.subr.mxu0 0.0
        %636 = vmatpush1.xpose.msra.mxu0 0.0
        %637 = vmatprep.mubr.f32.mxu0 0.0
        %638 = vmatmul.mubr.f32.gmra.mrb[0].mxu0 %v569
        %v639 = vpop.f32.mrb[0].mxu0
        %v640 = vadd.f32 0.0, %v639
        %v641 = vpop.f32.mrb[0].mxu0
        %642 = vdwg.mxu0
        %vm643 = vcmask 64512
        %v644 = vsel %vm643, %v640, -inf
        %645 = vmax.xlane.f32.xlu0 %v644
        %v646 = vpop.xlane.xlu0 %645
        %v647 = vsub.f32 %v640, %v646
        %v648 = vmul.f32 %v647, 1.442695
        %v649 = vpow.pop %v648
        %v650 = vsel %vm643, %v649, 0.0
        %651 = vadd.xlane.f32.xlu0 %v650
        %v652 = vpop.xlane.xlu0 %651
        %v653 = vrcp.pop %v652
        %v654 = vmul.f32 %v649, %v653
        %655 = vrot.lane.b32.xlu0 %v560, 64
        %v656 = vpop.permute.xlu0 %655
        %v659 = vsel %vm643, %v654, 0
        %661 = vmatprep.subr.mxu0 0.0
        %662 = vmatpush1.msra.mxu0 %v656
        %663 = vmatprep.subr.mxu0 0.0
        %664 = vmatpush1.msra.mxu0 0.0
        %665 = vmatprep.subr.mxu0 0.0
        %666 = vmatpush1.msra.mxu0 0.0
        %667 = vmatprep.subr.mxu0 0.0
        %668 = vmatpush1.msra.mxu0 0.0
        %669 = vmatprep.subr.mxu0 0.0
        %670 = vmatpush1.msra.mxu0 0.0
        %671 = vmatprep.subr.mxu0 0.0
        %672 = vmatpush1.msra.mxu0 0.0
        %673 = vmatprep.subr.mxu0 0.0
        %674 = vmatpush1.msra.mxu0 0.0
        %675 = vmatprep.subr.mxu0 0.0
        %676 = vmatpush1.msra.mxu0 0.0
        %677 = vmatprep.subr.mxu0 0.0
        %678 = vmatpush1.msra.mxu0 0.0
        %679 = vmatprep.subr.mxu0 0.0
        %680 = vmatpush1.msra.mxu0 0.0
        %681 = vmatprep.subr.mxu0 0.0
        %682 = vmatpush1.msra.mxu0 0.0
        %683 = vmatprep.subr.mxu0 0.0
        %684 = vmatpush1.msra.mxu0 0.0
        %685 = vmatprep.subr.mxu0 0.0
        %686 = vmatpush1.msra.mxu0 0.0
        %687 = vmatprep.subr.mxu0 0.0
        %688 = vmatpush1.msra.mxu0 0.0
        %689 = vmatprep.subr.mxu0 0.0
        %690 = vmatpush1.msra.mxu0 0.0
        %691 = vmatprep.subr.mxu0 0.0
        %692 = vmatpush1.msra.mxu0 0.0
        %693 = vmatprep.subr.mxu0 0.0
        %694 = vmatpush1.msra.mxu0 0.0
        %695 = vmatprep.subr.mxu0 0.0
        %696 = vmatpush1.msra.mxu0 0.0
        %697 = vmatprep.subr.mxu0 0.0
        %698 = vmatpush1.msra.mxu0 0.0
        %699 = vmatprep.subr.mxu0 0.0
        %700 = vmatpush1.msra.mxu0 0.0
        %701 = vmatprep.subr.mxu0 0.0
        %702 = vmatpush1.msra.mxu0 0.0
        %703 = vmatprep.subr.mxu0 0.0
        %704 = vmatpush1.msra.mxu0 0.0
        %705 = vmatprep.subr.mxu0 0.0
        %706 = vmatpush1.msra.mxu0 0.0
        %707 = vmatprep.subr.mxu0 0.0
        %708 = vmatpush1.msra.mxu0 0.0
        %709 = vmatprep.subr.mxu0 0.0
        %710 = vmatpush1.msra.mxu0 0.0
        %711 = vmatprep.subr.mxu0 0.0
        %712 = vmatpush1.msra.mxu0 0.0
        %713 = vmatprep.subr.mxu0 0.0
        %714 = vmatpush1.msra.mxu0 0.0
        %715 = vmatprep.subr.mxu0 0.0
        %716 = vmatpush1.msra.mxu0 0.0
        %717 = vmatprep.subr.mxu0 0.0
        %718 = vmatpush1.msra.mxu0 0.0
        %719 = vmatprep.subr.mxu0 0.0
        %720 = vmatpush1.msra.mxu0 0.0
        %721 = vmatprep.subr.mxu0 0.0
        %722 = vmatpush1.msra.mxu0 0.0
        %723 = vmatprep.subr.mxu0 0.0
        %724 = vmatpush1.msra.mxu0 0.0
        %725 = vmatprep.mubr.f32.mxu0 0.0
        %726 = vmatmul.mubr.f32.gmra.mrb[0].mxu0 %v659
        %v727 = vpop.f32.mrb[0].mxu0
        %v728 = vadd.f32 0.0, %v727
        %v729 = vpop.f32.mrb[0].mxu0
        %730 = vdwg.mxu0
        %731 = vrot.lane.b32.xlu0 %v563, 124
        %v732 = vpop.permute.xlu0 %731
        %733 = vrot.lane.b32.xlu0 %v560, 92
        %v734 = vpop.permute.xlu0 %733
        %v735 = vsel %vm567, %v732, 0
        %v737 = vsel %vm567, %v734, 0
        %739 = vmatprep.subr.mxu0 0.0
        %740 = vmatpush1.xpose.msra.mxu0 %v737
        %741 = vmatprep.subr.mxu0 0.0
        %742 = vmatpush1.xpose.msra.mxu0 0.0
        %743 = vmatprep.subr.mxu0 0.0
        %744 = vmatpush1.xpose.msra.mxu0 0.0
        %745 = vmatprep.subr.mxu0 0.0
        %746 = vmatpush1.xpose.msra.mxu0 0.0
        %747 = vmatprep.subr.mxu0 0.0
        %748 = vmatpush1.xpose.msra.mxu0 0.0
        %749 = vmatprep.subr.mxu0 0.0
        %750 = vmatpush1.xpose.msra.mxu0 0.0
        %751 = vmatprep.subr.mxu0 0.0
        %752 = vmatpush1.xpose.msra.mxu0 0.0
        %753 = vmatprep.subr.mxu0 0.0
        %754 = vmatpush1.xpose.msra.mxu0 0.0
        %755 = vmatprep.subr.mxu0 0.0
        %756 = vmatpush1.xpose.msra.mxu0 0.0
        %757 = vmatprep.subr.mxu0 0.0
        %758 = vmatpush1.xpose.msra.mxu0 0.0
        %759 = vmatprep.subr.mxu0 0.0
        %760 = vmatpush1.xpose.msra.mxu0 0.0
        %761 = vmatprep.subr.mxu0 0.0
        %762 = vmatpush1.xpose.msra.mxu0 0.0
        %763 = vmatprep.subr.mxu0 0.0
        %764 = vmatpush1.xpose.msra.mxu0 0.0
        %765 = vmatprep.subr.mxu0 0.0
        %766 = vmatpush1.xpose.msra.mxu0 0.0
        %767 = vmatprep.subr.mxu0 0.0
        %768 = vmatpush1.xpose.msra.mxu0 0.0
        %769 = vmatprep.subr.mxu0 0.0
        %770 = vmatpush1.xpose.msra.mxu0 0.0
        %771 = vmatprep.subr.mxu0 0.0
        %772 = vmatpush1.xpose.msra.mxu0 0.0
        %773 = vmatprep.subr.mxu0 0.0
        %774 = vmatpush1.xpose.msra.mxu0 0.0
        %775 = vmatprep.subr.mxu0 0.0
        %776 = vmatpush1.xpose.msra.mxu0 0.0
        %777 = vmatprep.subr.mxu0 0.0
        %778 = vmatpush1.xpose.msra.mxu0 0.0
        %779 = vmatprep.subr.mxu0 0.0
        %780 = vmatpush1.xpose.msra.mxu0 0.0
        %781 = vmatprep.subr.mxu0 0.0
        %782 = vmatpush1.xpose.msra.mxu0 0.0
        %783 = vmatprep.subr.mxu0 0.0
        %784 = vmatpush1.xpose.msra.mxu0 0.0
        %785 = vmatprep.subr.mxu0 0.0
        %786 = vmatpush1.xpose.msra.mxu0 0.0
        %787 = vmatprep.subr.mxu0 0.0
        %788 = vmatpush1.xpose.msra.mxu0 0.0
        %789 = vmatprep.subr.mxu0 0.0
        %790 = vmatpush1.xpose.msra.mxu0 0.0
        %791 = vmatprep.subr.mxu0 0.0
        %792 = vmatpush1.xpose.msra.mxu0 0.0
        %793 = vmatprep.subr.mxu0 0.0
        %794 = vmatpush1.xpose.msra.mxu0 0.0
        %795 = vmatprep.subr.mxu0 0.0
        %796 = vmatpush1.xpose.msra.mxu0 0.0
        %797 = vmatprep.subr.mxu0 0.0
        %798 = vmatpush1.xpose.msra.mxu0 0.0
        %799 = vmatprep.subr.mxu0 0.0
        %800 = vmatpush1.xpose.msra.mxu0 0.0
        %801 = vmatprep.subr.mxu0 0.0
        %802 = vmatpush1.xpose.msra.mxu0 0.0
        %803 = vmatprep.mubr.f32.mxu0 0.0
        %804 = vmatmul.mubr.f32.gmra.mrb[0].mxu0 %v735
        %v805 = vpop.f32.mrb[0].mxu0
        %v806 = vadd.f32 0.0, %v805
        %v807 = vpop.f32.mrb[0].mxu0
        %808 = vdwg.mxu0
        %v809 = vsel %vm643, %v806, -inf
        %810 = vmax.xlane.f32.xlu0 %v809
        %v811 = vpop.xlane.xlu0 %810
        %v812 = vsub.f32 %v806, %v811
        %v813 = vmul.f32 %v812, 1.442695
        %v814 = vpow.pop %v813
        %v815 = vsel %vm643, %v814, 0.0
        %816 = vadd.xlane.f32.xlu0 %v815
        %v817 = vpop.xlane.xlu0 %816
        %v818 = vrcp.pop %v817
        %v819 = vmul.f32 %v814, %v818
        %820 = vrot.lane.b32.xlu0 %v560, 60
        %v821 = vpop.permute.xlu0 %820
        %v824 = vsel %vm643, %v819, 0
        %826 = vmatprep.subr.mxu0 0.0
        %827 = vmatpush1.msra.mxu0 %v821
        %828 = vmatprep.subr.mxu0 0.0
        %829 = vmatpush1.msra.mxu0 0.0
        %830 = vmatprep.subr.mxu0 0.0
        %831 = vmatpush1.msra.mxu0 0.0
        %832 = vmatprep.subr.mxu0 0.0
        %833 = vmatpush1.msra.mxu0 0.0
        %834 = vmatprep.subr.mxu0 0.0
        %835 = vmatpush1.msra.mxu0 0.0
        %836 = vmatprep.subr.mxu0 0.0
        %837 = vmatpush1.msra.mxu0 0.0
        %838 = vmatprep.subr.mxu0 0.0
        %839 = vmatpush1.msra.mxu0 0.0
        %840 = vmatprep.subr.mxu0 0.0
        %841 = vmatpush1.msra.mxu0 0.0
        %842 = vmatprep.subr.mxu0 0.0
        %843 = vmatpush1.msra.mxu0 0.0
        %844 = vmatprep.subr.mxu0 0.0
        %845 = vmatpush1.msra.mxu0 0.0
        %846 = vmatprep.subr.mxu0 0.0
        %847 = vmatpush1.msra.mxu0 0.0
        %848 = vmatprep.subr.mxu0 0.0
        %849 = vmatpush1.msra.mxu0 0.0
        %850 = vmatprep.subr.mxu0 0.0
        %851 = vmatpush1.msra.mxu0 0.0
        %852 = vmatprep.subr.mxu0 0.0
        %853 = vmatpush1.msra.mxu0 0.0
        %854 = vmatprep.subr.mxu0 0.0
        %855 = vmatpush1.msra.mxu0 0.0
        %856 = vmatprep.subr.mxu0 0.0
        %857 = vmatpush1.msra.mxu0 0.0
        %858 = vmatprep.subr.mxu0 0.0
        %859 = vmatpush1.msra.mxu0 0.0
        %860 = vmatprep.subr.mxu0 0.0
        %861 = vmatpush1.msra.mxu0 0.0
        %862 = vmatprep.subr.mxu0 0.0
        %863 = vmatpush1.msra.mxu0 0.0
        %864 = vmatprep.subr.mxu0 0.0
        %865 = vmatpush1.msra.mxu0 0.0
        %866 = vmatprep.subr.mxu0 0.0
        %867 = vmatpush1.msra.mxu0 0.0
        %868 = vmatprep.subr.mxu0 0.0
        %869 = vmatpush1.msra.mxu0 0.0
        %870 = vmatprep.subr.mxu0 0.0
        %871 = vmatpush1.msra.mxu0 0.0
        %872 = vmatprep.subr.mxu0 0.0
        %873 = vmatpush1.msra.mxu0 0.0
        %874 = vmatprep.subr.mxu0 0.0
        %875 = vmatpush1.msra.mxu0 0.0
        %876 = vmatprep.subr.mxu0 0.0
        %877 = vmatpush1.msra.mxu0 0.0
        %878 = vmatprep.subr.mxu0 0.0
        %879 = vmatpush1.msra.mxu0 0.0
        %880 = vmatprep.subr.mxu0 0.0
        %881 = vmatpush1.msra.mxu0 0.0
        %882 = vmatprep.subr.mxu0 0.0
        %883 = vmatpush1.msra.mxu0 0.0
        %884 = vmatprep.subr.mxu0 0.0
        %885 = vmatpush1.msra.mxu0 0.0
        %886 = vmatprep.subr.mxu0 0.0
        %887 = vmatpush1.msra.mxu0 0.0
        %888 = vmatprep.subr.mxu0 0.0
        %889 = vmatpush1.msra.mxu0 0.0
        %890 = vmatprep.mubr.f32.mxu0 0.0
        %891 = vmatmul.mubr.f32.gmra.mrb[0].mxu0 %v824
        %v892 = vpop.f32.mrb[0].mxu0
        %v893 = vadd.f32 0.0, %v892
        %v894 = vpop.f32.mrb[0].mxu0
        %895 = vdwg.mxu0
        %896 = vrot.lane.b32.xlu0 %v563, 120
        %v897 = vpop.permute.xlu0 %896
        %898 = vrot.lane.b32.xlu0 %v560, 88
        %v899 = vpop.permute.xlu0 %898
        %v900 = vsel %vm567, %v897, 0
        %v902 = vsel %vm567, %v899, 0
        %904 = vmatprep.subr.mxu0 0.0
        %905 = vmatpush1.xpose.msra.mxu0 %v902
        %906 = vmatprep.subr.mxu0 0.0
        %907 = vmatpush1.xpose.msra.mxu0 0.0
        %908 = vmatprep.subr.mxu0 0.0
        %909 = vmatpush1.xpose.msra.mxu0 0.0
        %910 = vmatprep.subr.mxu0 0.0
        %911 = vmatpush1.xpose.msra.mxu0 0.0
        %912 = vmatprep.subr.mxu0 0.0
        %913 = vmatpush1.xpose.msra.mxu0 0.0
        %914 = vmatprep.subr.mxu0 0.0
        %915 = vmatpush1.xpose.msra.mxu0 0.0
        %916 = vmatprep.subr.mxu0 0.0
        %917 = vmatpush1.xpose.msra.mxu0 0.0
        %918 = vmatprep.subr.mxu0 0.0
        %919 = vmatpush1.xpose.msra.mxu0 0.0
        %920 = vmatprep.subr.mxu0 0.0
        %921 = vmatpush1.xpose.msra.mxu0 0.0
        %922 = vmatprep.subr.mxu0 0.0
        %923 = vmatpush1.xpose.msra.mxu0 0.0
        %924 = vmatprep.subr.mxu0 0.0
        %925 = vmatpush1.xpose.msra.mxu0 0.0
        %926 = vmatprep.subr.mxu0 0.0
        %927 = vmatpush1.xpose.msra.mxu0 0.0
        %928 = vmatprep.subr.mxu0 0.0
        %929 = vmatpush1.xpose.msra.mxu0 0.0
        %930 = vmatprep.subr.mxu0 0.0
        %931 = vmatpush1.xpose.msra.mxu0 0.0
        %932 = vmatprep.subr.mxu0 0.0
        %933 = vmatpush1.xpose.msra.mxu0 0.0
        %934 = vmatprep.subr.mxu0 0.0
        %935 = vmatpush1.xpose.msra.mxu0 0.0
        %936 = vmatprep.subr.mxu0 0.0
        %937 = vmatpush1.xpose.msra.mxu0 0.0
        %938 = vmatprep.subr.mxu0 0.0
        %939 = vmatpush1.xpose.msra.mxu0 0.0
        %940 = vmatprep.subr.mxu0 0.0
        %941 = vmatpush1.xpose.msra.mxu0 0.0
        %942 = vmatprep.subr.mxu0 0.0
        %943 = vmatpush1.xpose.msra.mxu0 0.0
        %944 = vmatprep.subr.mxu0 0.0
        %945 = vmatpush1.xpose.msra.mxu0 0.0
        %946 = vmatprep.subr.mxu0 0.0
        %947 = vmatpush1.xpose.msra.mxu0 0.0
        %948 = vmatprep.subr.mxu0 0.0
        %949 = vmatpush1.xpose.msra.mxu0 0.0
        %950 = vmatprep.subr.mxu0 0.0
        %951 = vmatpush1.xpose.msra.mxu0 0.0
        %952 = vmatprep.subr.mxu0 0.0
        %953 = vmatpush1.xpose.msra.mxu0 0.0
        %954 = vmatprep.subr.mxu0 0.0
        %955 = vmatpush1.xpose.msra.mxu0 0.0
        %956 = vmatprep.subr.mxu0 0.0
        %957 = vmatpush1.xpose.msra.mxu0 0.0
        %958 = vmatprep.subr.mxu0 0.0
        %959 = vmatpush1.xpose.msra.mxu0 0.0
        %960 = vmatprep.subr.mxu0 0.0
        %961 = vmatpush1.xpose.msra.mxu0 0.0
        %962 = vmatprep.subr.mxu0 0.0
        %963 = vmatpush1.xpose.msra.mxu0 0.0
        %964 = vmatprep.subr.mxu0 0.0
        %965 = vmatpush1.xpose.msra.mxu0 0.0
        %966 = vmatprep.subr.mxu0 0.0
        %967 = vmatpush1.xpose.msra.mxu0 0.0
        %968 = vmatprep.mubr.f32.mxu0 0.0
        %969 = vmatmul.mubr.f32.gmra.mrb[0].mxu0 %v900
        %v970 = vpop.f32.mrb[0].mxu0
        %v971 = vadd.f32 0.0, %v970
        %v972 = vpop.f32.mrb[0].mxu0
        %973 = vdwg.mxu0
        %v974 = vsel %vm643, %v971, -inf
        %975 = vmax.xlane.f32.xlu0 %v974
        %v976 = vpop.xlane.xlu0 %975
        %v977 = vsub.f32 %v971, %v976
        %v978 = vmul.f32 %v977, 1.442695
        %v979 = vpow.pop %v978
        %v980 = vsel %vm643, %v979, 0.0
        %981 = vadd.xlane.f32.xlu0 %v980
        %v982 = vpop.xlane.xlu0 %981
        %v983 = vrcp.pop %v982
        %v984 = vmul.f32 %v979, %v983
        %985 = vrot.lane.b32.xlu0 %v560, 56
        %v986 = vpop.permute.xlu0 %985
        %v989 = vsel %vm643, %v984, 0
        %991 = vmatprep.subr.mxu0 0.0
        %992 = vmatpush1.msra.mxu0 %v986
        %993 = vmatprep.subr.mxu0 0.0
        %994 = vmatpush1.msra.mxu0 0.0
        %995 = vmatprep.subr.mxu0 0.0
        %996 = vmatpush1.msra.mxu0 0.0
        %997 = vmatprep.subr.mxu0 0.0
        %998 = vmatpush1.msra.mxu0 0.0
        %999 = vmatprep.subr.mxu0 0.0
        %1000 = vmatpush1.msra.mxu0 0.0
        %1001 = vmatprep.subr.mxu0 0.0
        %1002 = vmatpush1.msra.mxu0 0.0
        %1003 = vmatprep.subr.mxu0 0.0
        %1004 = vmatpush1.msra.mxu0 0.0
        %1005 = vmatprep.subr.mxu0 0.0
        %1006 = vmatpush1.msra.mxu0 0.0
        %1007 = vmatprep.subr.mxu0 0.0
        %1008 = vmatpush1.msra.mxu0 0.0
        %1009 = vmatprep.subr.mxu0 0.0
        %1010 = vmatpush1.msra.mxu0 0.0
        %1011 = vmatprep.subr.mxu0 0.0
        %1012 = vmatpush1.msra.mxu0 0.0
        %1013 = vmatprep.subr.mxu0 0.0
        %1014 = vmatpush1.msra.mxu0 0.0
        %1015 = vmatprep.subr.mxu0 0.0
        %1016 = vmatpush1.msra.mxu0 0.0
        %1017 = vmatprep.subr.mxu0 0.0
        %1018 = vmatpush1.msra.mxu0 0.0
        %1019 = vmatprep.subr.mxu0 0.0
        %1020 = vmatpush1.msra.mxu0 0.0
        %1021 = vmatprep.subr.mxu0 0.0
        %1022 = vmatpush1.msra.mxu0 0.0
        %1023 = vmatprep.subr.mxu0 0.0
        %1024 = vmatpush1.msra.mxu0 0.0
        %1025 = vmatprep.subr.mxu0 0.0
        %1026 = vmatpush1.msra.mxu0 0.0
        %1027 = vmatprep.subr.mxu0 0.0
        %1028 = vmatpush1.msra.mxu0 0.0
        %1029 = vmatprep.subr.mxu0 0.0
        %1030 = vmatpush1.msra.mxu0 0.0
        %1031 = vmatprep.subr.mxu0 0.0
        %1032 = vmatpush1.msra.mxu0 0.0
        %1033 = vmatprep.subr.mxu0 0.0
        %1034 = vmatpush1.msra.mxu0 0.0
        %1035 = vmatprep.subr.mxu0 0.0
        %1036 = vmatpush1.msra.mxu0 0.0
        %1037 = vmatprep.subr.mxu0 0.0
        %1038 = vmatpush1.msra.mxu0 0.0
        %1039 = vmatprep.subr.mxu0 0.0
        %1040 = vmatpush1.msra.mxu0 0.0
        %1041 = vmatprep.subr.mxu0 0.0
        %1042 = vmatpush1.msra.mxu0 0.0
        %1043 = vmatprep.subr.mxu0 0.0
        %1044 = vmatpush1.msra.mxu0 0.0
        %1045 = vmatprep.subr.mxu0 0.0
        %1046 = vmatpush1.msra.mxu0 0.0
        %1047 = vmatprep.subr.mxu0 0.0
        %1048 = vmatpush1.msra.mxu0 0.0
        %1049 = vmatprep.subr.mxu0 0.0
        %1050 = vmatpush1.msra.mxu0 0.0
        %1051 = vmatprep.subr.mxu0 0.0
        %1052 = vmatpush1.msra.mxu0 0.0
        %1053 = vmatprep.subr.mxu0 0.0
        %1054 = vmatpush1.msra.mxu0 0.0
        %1055 = vmatprep.mubr.f32.mxu0 0.0
        %1056 = vmatmul.mubr.f32.gmra.mrb[0].mxu0 %v989
        %v1057 = vpop.f32.mrb[0].mxu0
        %v1058 = vadd.f32 0.0, %v1057
        %v1059 = vpop.f32.mrb[0].mxu0
        %1060 = vdwg.mxu0
        %1061 = vrot.lane.b32.xlu0 %v563, 116
        %v1062 = vpop.permute.xlu0 %1061
        %1063 = vrot.lane.b32.xlu0 %v560, 84
        %v1064 = vpop.permute.xlu0 %1063
        %v1065 = vsel %vm567, %v1062, 0
        %v1067 = vsel %vm567, %v1064, 0
        %1069 = vmatprep.subr.mxu0 0.0
        %1070 = vmatpush1.xpose.msra.mxu0 %v1067
        %1071 = vmatprep.subr.mxu0 0.0
        %1072 = vmatpush1.xpose.msra.mxu0 0.0
        %1073 = vmatprep.subr.mxu0 0.0
        %1074 = vmatpush1.xpose.msra.mxu0 0.0
        %1075 = vmatprep.subr.mxu0 0.0
        %1076 = vmatpush1.xpose.msra.mxu0 0.0
        %1077 = vmatprep.subr.mxu0 0.0
        %1078 = vmatpush1.xpose.msra.mxu0 0.0
        %1079 = vmatprep.subr.mxu0 0.0
        %1080 = vmatpush1.xpose.msra.mxu0 0.0
        %1081 = vmatprep.subr.mxu0 0.0
        %1082 = vmatpush1.xpose.msra.mxu0 0.0
        %1083 = vmatprep.subr.mxu0 0.0
        %1084 = vmatpush1.xpose.msra.mxu0 0.0
        %1085 = vmatprep.subr.mxu0 0.0
        %1086 = vmatpush1.xpose.msra.mxu0 0.0
        %1087 = vmatprep.subr.mxu0 0.0
        %1088 = vmatpush1.xpose.msra.mxu0 0.0
        %1089 = vmatprep.subr.mxu0 0.0
        %1090 = vmatpush1.xpose.msra.mxu0 0.0
        %1091 = vmatprep.subr.mxu0 0.0
        %1092 = vmatpush1.xpose.msra.mxu0 0.0
        %1093 = vmatprep.subr.mxu0 0.0
        %1094 = vmatpush1.xpose.msra.mxu0 0.0
        %1095 = vmatprep.subr.mxu0 0.0
        %1096 = vmatpush1.xpose.msra.mxu0 0.0
        %1097 = vmatprep.subr.mxu0 0.0
        %1098 = vmatpush1.xpose.msra.mxu0 0.0
        %1099 = vmatprep.subr.mxu0 0.0
        %1100 = vmatpush1.xpose.msra.mxu0 0.0
        %1101 = vmatprep.subr.mxu0 0.0
        %1102 = vmatpush1.xpose.msra.mxu0 0.0
        %1103 = vmatprep.subr.mxu0 0.0
        %1104 = vmatpush1.xpose.msra.mxu0 0.0
        %1105 = vmatprep.subr.mxu0 0.0
        %1106 = vmatpush1.xpose.msra.mxu0 0.0
        %1107 = vmatprep.subr.mxu0 0.0
        %1108 = vmatpush1.xpose.msra.mxu0 0.0
        %1109 = vmatprep.subr.mxu0 0.0
        %1110 = vmatpush1.xpose.msra.mxu0 0.0
        %1111 = vmatprep.subr.mxu0 0.0
        %1112 = vmatpush1.xpose.msra.mxu0 0.0
        %1113 = vmatprep.subr.mxu0 0.0
        %1114 = vmatpush1.xpose.msra.mxu0 0.0
        %1115 = vmatprep.subr.mxu0 0.0
        %1116 = vmatpush1.xpose.msra.mxu0 0.0
        %1117 = vmatprep.subr.mxu0 0.0
        %1118 = vmatpush1.xpose.msra.mxu0 0.0
        %1119 = vmatprep.subr.mxu0 0.0
        %1120 = vmatpush1.xpose.msra.mxu0 0.0
        %1121 = vmatprep.subr.mxu0 0.0
        %1122 = vmatpush1.xpose.msra.mxu0 0.0
        %1123 = vmatprep.subr.mxu0 0.0
        %1124 = vmatpush1.xpose.msra.mxu0 0.0
        %1125 = vmatprep.subr.mxu0 0.0
        %1126 = vmatpush1.xpose.msra.mxu0 0.0
        %1127 = vmatprep.subr.mxu0 0.0
        %1128 = vmatpush1.xpose.msra.mxu0 0.0
        %1129 = vmatprep.subr.mxu0 0.0
        %1130 = vmatpush1.xpose.msra.mxu0 0.0
        %1131 = vmatprep.subr.mxu0 0.0
        %1132 = vmatpush1.xpose.msra.mxu0 0.0
        %1133 = vmatprep.mubr.f32.mxu0 0.0
        %1134 = vmatmul.mubr.f32.gmra.mrb[0].mxu0 %v1065
        %v1135 = vpop.f32.mrb[0].mxu0
        %v1136 = vadd.f32 0.0, %v1135
        %v1137 = vpop.f32.mrb[0].mxu0
        %1138 = vdwg.mxu0
        %v1139 = vsel %vm643, %v1136, -inf
        %1140 = vmax.xlane.f32.xlu0 %v1139
        %v1141 = vpop.xlane.xlu0 %1140
        %v1142 = vsub.f32 %v1136, %v1141
        %v1143 = vmul.f32 %v1142, 1.442695
        %v1144 = vpow.pop %v1143
        %v1145 = vsel %vm643, %v1144, 0.0
        %1146 = vadd.xlane.f32.xlu0 %v1145
        %v1147 = vpop.xlane.xlu0 %1146
        %v1148 = vrcp.pop %v1147
        %v1149 = vmul.f32 %v1144, %v1148
        %1150 = vrot.lane.b32.xlu0 %v560, 52
        %v1151 = vpop.permute.xlu0 %1150
        %v1154 = vsel %vm643, %v1149, 0
        %1156 = vmatprep.subr.mxu0 0.0
        %1157 = vmatpush1.msra.mxu0 %v1151
        %1158 = vmatprep.subr.mxu0 0.0
        %1159 = vmatpush1.msra.mxu0 0.0
        %1160 = vmatprep.subr.mxu0 0.0
        %1161 = vmatpush1.msra.mxu0 0.0
        %1162 = vmatprep.subr.mxu0 0.0
        %1163 = vmatpush1.msra.mxu0 0.0
        %1164 = vmatprep.subr.mxu0 0.0
        %1165 = vmatpush1.msra.mxu0 0.0
        %1166 = vmatprep.subr.mxu0 0.0
        %1167 = vmatpush1.msra.mxu0 0.0
        %1168 = vmatprep.subr.mxu0 0.0
        %1169 = vmatpush1.msra.mxu0 0.0
        %1170 = vmatprep.subr.mxu0 0.0
        %1171 = vmatpush1.msra.mxu0 0.0
        %1172 = vmatprep.subr.mxu0 0.0
        %1173 = vmatpush1.msra.mxu0 0.0
        %1174 = vmatprep.subr.mxu0 0.0
        %1175 = vmatpush1.msra.mxu0 0.0
        %1176 = vmatprep.subr.mxu0 0.0
        %1177 = vmatpush1.msra.mxu0 0.0
        %1178 = vmatprep.subr.mxu0 0.0
        %1179 = vmatpush1.msra.mxu0 0.0
        %1180 = vmatprep.subr.mxu0 0.0
        %1181 = vmatpush1.msra.mxu0 0.0
        %1182 = vmatprep.subr.mxu0 0.0
        %1183 = vmatpush1.msra.mxu0 0.0
        %1184 = vmatprep.subr.mxu0 0.0
        %1185 = vmatpush1.msra.mxu0 0.0
        %1186 = vmatprep.subr.mxu0 0.0
        %1187 = vmatpush1.msra.mxu0 0.0
        %1188 = vmatprep.subr.mxu0 0.0
        %1189 = vmatpush1.msra.mxu0 0.0
        %1190 = vmatprep.subr.mxu0 0.0
        %1191 = vmatpush1.msra.mxu0 0.0
        %1192 = vmatprep.subr.mxu0 0.0
        %1193 = vmatpush1.msra.mxu0 0.0
        %1194 = vmatprep.subr.mxu0 0.0
        %1195 = vmatpush1.msra.mxu0 0.0
        %1196 = vmatprep.subr.mxu0 0.0
        %1197 = vmatpush1.msra.mxu0 0.0
        %1198 = vmatprep.subr.mxu0 0.0
        %1199 = vmatpush1.msra.mxu0 0.0
        %1200 = vmatprep.subr.mxu0 0.0
        %1201 = vmatpush1.msra.mxu0 0.0
        %1202 = vmatprep.subr.mxu0 0.0
        %1203 = vmatpush1.msra.mxu0 0.0
        %1204 = vmatprep.subr.mxu0 0.0
        %1205 = vmatpush1.msra.mxu0 0.0
        %1206 = vmatprep.subr.mxu0 0.0
        %1207 = vmatpush1.msra.mxu0 0.0
        %1208 = vmatprep.subr.mxu0 0.0
        %1209 = vmatpush1.msra.mxu0 0.0
        %1210 = vmatprep.subr.mxu0 0.0
        %1211 = vmatpush1.msra.mxu0 0.0
        %1212 = vmatprep.subr.mxu0 0.0
        %1213 = vmatpush1.msra.mxu0 0.0
        %1214 = vmatprep.subr.mxu0 0.0
        %1215 = vmatpush1.msra.mxu0 0.0
        %1216 = vmatprep.subr.mxu0 0.0
        %1217 = vmatpush1.msra.mxu0 0.0
        %1218 = vmatprep.subr.mxu0 0.0
        %1219 = vmatpush1.msra.mxu0 0.0
        %1220 = vmatprep.mubr.f32.mxu0 0.0
        %1221 = vmatmul.mubr.f32.gmra.mrb[0].mxu0 %v1154
        %v1222 = vpop.f32.mrb[0].mxu0
        %v1223 = vadd.f32 0.0, %v1222
        %v1224 = vpop.f32.mrb[0].mxu0
        %1225 = vdwg.mxu0
        %1226 = vrot.lane.b32.xlu0 %v563, 112
        %v1227 = vpop.permute.xlu0 %1226
        %1228 = vrot.lane.b32.xlu0 %v560, 80
        %v1229 = vpop.permute.xlu0 %1228
        %v1230 = vsel %vm567, %v1227, 0
        %v1232 = vsel %vm567, %v1229, 0
        %1234 = vmatprep.subr.mxu0 0.0
        %1235 = vmatpush1.xpose.msra.mxu0 %v1232
        %1236 = vmatprep.subr.mxu0 0.0
        %1237 = vmatpush1.xpose.msra.mxu0 0.0
        %1238 = vmatprep.subr.mxu0 0.0
        %1239 = vmatpush1.xpose.msra.mxu0 0.0
        %1240 = vmatprep.subr.mxu0 0.0
        %1241 = vmatpush1.xpose.msra.mxu0 0.0
        %1242 = vmatprep.subr.mxu0 0.0
        %1243 = vmatpush1.xpose.msra.mxu0 0.0
        %1244 = vmatprep.subr.mxu0 0.0
        %1245 = vmatpush1.xpose.msra.mxu0 0.0
        %1246 = vmatprep.subr.mxu0 0.0
        %1247 = vmatpush1.xpose.msra.mxu0 0.0
        %1248 = vmatprep.subr.mxu0 0.0
        %1249 = vmatpush1.xpose.msra.mxu0 0.0
        %1250 = vmatprep.subr.mxu0 0.0
        %1251 = vmatpush1.xpose.msra.mxu0 0.0
        %1252 = vmatprep.subr.mxu0 0.0
        %1253 = vmatpush1.xpose.msra.mxu0 0.0
        %1254 = vmatprep.subr.mxu0 0.0
        %1255 = vmatpush1.xpose.msra.mxu0 0.0
        %1256 = vmatprep.subr.mxu0 0.0
        %1257 = vmatpush1.xpose.msra.mxu0 0.0
        %1258 = vmatprep.subr.mxu0 0.0
        %1259 = vmatpush1.xpose.msra.mxu0 0.0
        %1260 = vmatprep.subr.mxu0 0.0
        %1261 = vmatpush1.xpose.msra.mxu0 0.0
        %1262 = vmatprep.subr.mxu0 0.0
        %1263 = vmatpush1.xpose.msra.mxu0 0.0
        %1264 = vmatprep.subr.mxu0 0.0
        %1265 = vmatpush1.xpose.msra.mxu0 0.0
        %1266 = vmatprep.subr.mxu0 0.0
        %1267 = vmatpush1.xpose.msra.mxu0 0.0
        %1268 = vmatprep.subr.mxu0 0.0
        %1269 = vmatpush1.xpose.msra.mxu0 0.0
        %1270 = vmatprep.subr.mxu0 0.0
        %1271 = vmatpush1.xpose.msra.mxu0 0.0
        %1272 = vmatprep.subr.mxu0 0.0
        %1273 = vmatpush1.xpose.msra.mxu0 0.0
        %1274 = vmatprep.subr.mxu0 0.0
        %1275 = vmatpush1.xpose.msra.mxu0 0.0
        %1276 = vmatprep.subr.mxu0 0.0
        %1277 = vmatpush1.xpose.msra.mxu0 0.0
        %1278 = vmatprep.subr.mxu0 0.0
        %1279 = vmatpush1.xpose.msra.mxu0 0.0
        %1280 = vmatprep.subr.mxu0 0.0
        %1281 = vmatpush1.xpose.msra.mxu0 0.0
        %1282 = vmatprep.subr.mxu0 0.0
        %1283 = vmatpush1.xpose.msra.mxu0 0.0
        %1284 = vmatprep.subr.mxu0 0.0
        %1285 = vmatpush1.xpose.msra.mxu0 0.0
        %1286 = vmatprep.subr.mxu0 0.0
        %1287 = vmatpush1.xpose.msra.mxu0 0.0
        %1288 = vmatprep.subr.mxu0 0.0
        %1289 = vmatpush1.xpose.msra.mxu0 0.0
        %1290 = vmatprep.subr.mxu0 0.0
        %1291 = vmatpush1.xpose.msra.mxu0 0.0
        %1292 = vmatprep.subr.mxu0 0.0
        %1293 = vmatpush1.xpose.msra.mxu0 0.0
        %1294 = vmatprep.subr.mxu0 0.0
        %1295 = vmatpush1.xpose.msra.mxu0 0.0
        %1296 = vmatprep.subr.mxu0 0.0
        %1297 = vmatpush1.xpose.msra.mxu0 0.0
        %1298 = vmatprep.mubr.f32.mxu0 0.0
        %1299 = vmatmul.mubr.f32.gmra.mrb[0].mxu0 %v1230
        %v1300 = vpop.f32.mrb[0].mxu0
        %v1301 = vadd.f32 0.0, %v1300
        %v1302 = vpop.f32.mrb[0].mxu0
        %1303 = vdwg.mxu0
        %v1304 = vsel %vm643, %v1301, -inf
        %1305 = vmax.xlane.f32.xlu0 %v1304
        %v1306 = vpop.xlane.xlu0 %1305
        %v1307 = vsub.f32 %v1301, %v1306
        %v1308 = vmul.f32 %v1307, 1.442695
        %v1309 = vpow.pop %v1308
        %v1310 = vsel %vm643, %v1309, 0.0
        %1311 = vadd.xlane.f32.xlu0 %v1310
        %v1312 = vpop.xlane.xlu0 %1311
        %v1313 = vrcp.pop %v1312
        %v1314 = vmul.f32 %v1309, %v1313
        %1315 = vrot.lane.b32.xlu0 %v560, 48
        %v1316 = vpop.permute.xlu0 %1315
        %v1319 = vsel %vm643, %v1314, 0
        %1321 = vmatprep.subr.mxu0 0.0
        %1322 = vmatpush1.msra.mxu0 %v1316
        %1323 = vmatprep.subr.mxu0 0.0
        %1324 = vmatpush1.msra.mxu0 0.0
        %1325 = vmatprep.subr.mxu0 0.0
        %1326 = vmatpush1.msra.mxu0 0.0
        %1327 = vmatprep.subr.mxu0 0.0
        %1328 = vmatpush1.msra.mxu0 0.0
        %1329 = vmatprep.subr.mxu0 0.0
        %1330 = vmatpush1.msra.mxu0 0.0
        %1331 = vmatprep.subr.mxu0 0.0
        %1332 = vmatpush1.msra.mxu0 0.0
        %1333 = vmatprep.subr.mxu0 0.0
        %1334 = vmatpush1.msra.mxu0 0.0
        %1335 = vmatprep.subr.mxu0 0.0
        %1336 = vmatpush1.msra.mxu0 0.0
        %1337 = vmatprep.subr.mxu0 0.0
        %1338 = vmatpush1.msra.mxu0 0.0
        %1339 = vmatprep.subr.mxu0 0.0
        %1340 = vmatpush1.msra.mxu0 0.0
        %1341 = vmatprep.subr.mxu0 0.0
        %1342 = vmatpush1.msra.mxu0 0.0
        %1343 = vmatprep.subr.mxu0 0.0
        %1344 = vmatpush1.msra.mxu0 0.0
        %1345 = vmatprep.subr.mxu0 0.0
        %1346 = vmatpush1.msra.mxu0 0.0
        %1347 = vmatprep.subr.mxu0 0.0
        %1348 = vmatpush1.msra.mxu0 0.0
        %1349 = vmatprep.subr.mxu0 0.0
        %1350 = vmatpush1.msra.mxu0 0.0
        %1351 = vmatprep.subr.mxu0 0.0
        %1352 = vmatpush1.msra.mxu0 0.0
        %1353 = vmatprep.subr.mxu0 0.0
        %1354 = vmatpush1.msra.mxu0 0.0
        %1355 = vmatprep.subr.mxu0 0.0
        %1356 = vmatpush1.msra.mxu0 0.0
        %1357 = vmatprep.subr.mxu0 0.0
        %1358 = vmatpush1.msra.mxu0 0.0
        %1359 = vmatprep.subr.mxu0 0.0
        %1360 = vmatpush1.msra.mxu0 0.0
        %1361 = vmatprep.subr.mxu0 0.0
        %1362 = vmatpush1.msra.mxu0 0.0
        %1363 = vmatprep.subr.mxu0 0.0
        %1364 = vmatpush1.msra.mxu0 0.0
        %1365 = vmatprep.subr.mxu0 0.0
        %1366 = vmatpush1.msra.mxu0 0.0
        %1367 = vmatprep.subr.mxu0 0.0
        %1368 = vmatpush1.msra.mxu0 0.0
        %1369 = vmatprep.subr.mxu0 0.0
        %1370 = vmatpush1.msra.mxu0 0.0
        %1371 = vmatprep.subr.mxu0 0.0
        %1372 = vmatpush1.msra.mxu0 0.0
        %1373 = vmatprep.subr.mxu0 0.0
        %1374 = vmatpush1.msra.mxu0 0.0
        %1375 = vmatprep.subr.mxu0 0.0
        %1376 = vmatpush1.msra.mxu0 0.0
        %1377 = vmatprep.subr.mxu0 0.0
        %1378 = vmatpush1.msra.mxu0 0.0
        %1379 = vmatprep.subr.mxu0 0.0
        %1380 = vmatpush1.msra.mxu0 0.0
        %1381 = vmatprep.subr.mxu0 0.0
        %1382 = vmatpush1.msra.mxu0 0.0
        %1383 = vmatprep.subr.mxu0 0.0
        %1384 = vmatpush1.msra.mxu0 0.0
        %1385 = vmatprep.mubr.f32.mxu0 0.0
        %1386 = vmatmul.mubr.f32.gmra.mrb[0].mxu0 %v1319
        %v1387 = vpop.f32.mrb[0].mxu0
        %v1388 = vadd.f32 0.0, %v1387
        %v1389 = vpop.f32.mrb[0].mxu0
        %1390 = vdwg.mxu0
        %1391 = vrot.lane.b32.xlu0 %v563, 108
        %v1392 = vpop.permute.xlu0 %1391
        %1393 = vrot.lane.b32.xlu0 %v560, 76
        %v1394 = vpop.permute.xlu0 %1393
        %v1395 = vsel %vm567, %v1392, 0
        %v1397 = vsel %vm567, %v1394, 0
        %1399 = vmatprep.subr.mxu0 0.0
        %1400 = vmatpush1.xpose.msra.mxu0 %v1397
        %1401 = vmatprep.subr.mxu0 0.0
        %1402 = vmatpush1.xpose.msra.mxu0 0.0
        %1403 = vmatprep.subr.mxu0 0.0
        %1404 = vmatpush1.xpose.msra.mxu0 0.0
        %1405 = vmatprep.subr.mxu0 0.0
        %1406 = vmatpush1.xpose.msra.mxu0 0.0
        %1407 = vmatprep.subr.mxu0 0.0
        %1408 = vmatpush1.xpose.msra.mxu0 0.0
        %1409 = vmatprep.subr.mxu0 0.0
        %1410 = vmatpush1.xpose.msra.mxu0 0.0
        %1411 = vmatprep.subr.mxu0 0.0
        %1412 = vmatpush1.xpose.msra.mxu0 0.0
        %1413 = vmatprep.subr.mxu0 0.0
        %1414 = vmatpush1.xpose.msra.mxu0 0.0
        %1415 = vmatprep.subr.mxu0 0.0
        %1416 = vmatpush1.xpose.msra.mxu0 0.0
        %1417 = vmatprep.subr.mxu0 0.0
        %1418 = vmatpush1.xpose.msra.mxu0 0.0
        %1419 = vmatprep.subr.mxu0 0.0
        %1420 = vmatpush1.xpose.msra.mxu0 0.0
        %1421 = vmatprep.subr.mxu0 0.0
        %1422 = vmatpush1.xpose.msra.mxu0 0.0
        %1423 = vmatprep.subr.mxu0 0.0
        %1424 = vmatpush1.xpose.msra.mxu0 0.0
        %1425 = vmatprep.subr.mxu0 0.0
        %1426 = vmatpush1.xpose.msra.mxu0 0.0
        %1427 = vmatprep.subr.mxu0 0.0
        %1428 = vmatpush1.xpose.msra.mxu0 0.0
        %1429 = vmatprep.subr.mxu0 0.0
        %1430 = vmatpush1.xpose.msra.mxu0 0.0
        %1431 = vmatprep.subr.mxu0 0.0
        %1432 = vmatpush1.xpose.msra.mxu0 0.0
        %1433 = vmatprep.subr.mxu0 0.0
        %1434 = vmatpush1.xpose.msra.mxu0 0.0
        %1435 = vmatprep.subr.mxu0 0.0
        %1436 = vmatpush1.xpose.msra.mxu0 0.0
        %1437 = vmatprep.subr.mxu0 0.0
        %1438 = vmatpush1.xpose.msra.mxu0 0.0
        %1439 = vmatprep.subr.mxu0 0.0
        %1440 = vmatpush1.xpose.msra.mxu0 0.0
        %1441 = vmatprep.subr.mxu0 0.0
        %1442 = vmatpush1.xpose.msra.mxu0 0.0
        %1443 = vmatprep.subr.mxu0 0.0
        %1444 = vmatpush1.xpose.msra.mxu0 0.0
        %1445 = vmatprep.subr.mxu0 0.0
        %1446 = vmatpush1.xpose.msra.mxu0 0.0
        %1447 = vmatprep.subr.mxu0 0.0
        %1448 = vmatpush1.xpose.msra.mxu0 0.0
        %1449 = vmatprep.subr.mxu0 0.0
        %1450 = vmatpush1.xpose.msra.mxu0 0.0
        %1451 = vmatprep.subr.mxu0 0.0
        %1452 = vmatpush1.xpose.msra.mxu0 0.0
        %1453 = vmatprep.subr.mxu0 0.0
        %1454 = vmatpush1.xpose.msra.mxu0 0.0
        %1455 = vmatprep.subr.mxu0 0.0
        %1456 = vmatpush1.xpose.msra.mxu0 0.0
        %1457 = vmatprep.subr.mxu0 0.0
        %1458 = vmatpush1.xpose.msra.mxu0 0.0
        %1459 = vmatprep.subr.mxu0 0.0
        %1460 = vmatpush1.xpose.msra.mxu0 0.0
        %1461 = vmatprep.subr.mxu0 0.0
        %1462 = vmatpush1.xpose.msra.mxu0 0.0
        %1463 = vmatprep.mubr.f32.mxu0 0.0
        %1464 = vmatmul.mubr.f32.gmra.mrb[0].mxu0 %v1395
        %v1465 = vpop.f32.mrb[0].mxu0
        %v1466 = vadd.f32 0.0, %v1465
        %v1467 = vpop.f32.mrb[0].mxu0
        %1468 = vdwg.mxu0
        %v1469 = vsel %vm643, %v1466, -inf
        %1470 = vmax.xlane.f32.xlu0 %v1469
        %v1471 = vpop.xlane.xlu0 %1470
        %v1472 = vsub.f32 %v1466, %v1471
        %v1473 = vmul.f32 %v1472, 1.442695
        %v1474 = vpow.pop %v1473
        %v1475 = vsel %vm643, %v1474, 0.0
        %1476 = vadd.xlane.f32.xlu0 %v1475
        %v1477 = vpop.xlane.xlu0 %1476
        %v1478 = vrcp.pop %v1477
        %v1479 = vmul.f32 %v1474, %v1478
        %1480 = vrot.lane.b32.xlu0 %v560, 44
        %v1481 = vpop.permute.xlu0 %1480
        %v1484 = vsel %vm643, %v1479, 0
        %1486 = vmatprep.subr.mxu0 0.0
        %1487 = vmatpush1.msra.mxu0 %v1481
        %1488 = vmatprep.subr.mxu0 0.0
        %1489 = vmatpush1.msra.mxu0 0.0
        %1490 = vmatprep.subr.mxu0 0.0
        %1491 = vmatpush1.msra.mxu0 0.0
        %1492 = vmatprep.subr.mxu0 0.0
        %1493 = vmatpush1.msra.mxu0 0.0
        %1494 = vmatprep.subr.mxu0 0.0
        %1495 = vmatpush1.msra.mxu0 0.0
        %1496 = vmatprep.subr.mxu0 0.0
        %1497 = vmatpush1.msra.mxu0 0.0
        %1498 = vmatprep.subr.mxu0 0.0
        %1499 = vmatpush1.msra.mxu0 0.0
        %1500 = vmatprep.subr.mxu0 0.0
        %1501 = vmatpush1.msra.mxu0 0.0
        %1502 = vmatprep.subr.mxu0 0.0
        %1503 = vmatpush1.msra.mxu0 0.0
        %1504 = vmatprep.subr.mxu0 0.0
        %1505 = vmatpush1.msra.mxu0 0.0
        %1506 = vmatprep.subr.mxu0 0.0
        %1507 = vmatpush1.msra.mxu0 0.0
        %1508 = vmatprep.subr.mxu0 0.0
        %1509 = vmatpush1.msra.mxu0 0.0
        %1510 = vmatprep.subr.mxu0 0.0
        %1511 = vmatpush1.msra.mxu0 0.0
        %1512 = vmatprep.subr.mxu0 0.0
        %1513 = vmatpush1.msra.mxu0 0.0
        %1514 = vmatprep.subr.mxu0 0.0
        %1515 = vmatpush1.msra.mxu0 0.0
        %1516 = vmatprep.subr.mxu0 0.0
        %1517 = vmatpush1.msra.mxu0 0.0
        %1518 = vmatprep.subr.mxu0 0.0
        %1519 = vmatpush1.msra.mxu0 0.0
        %1520 = vmatprep.subr.mxu0 0.0
        %1521 = vmatpush1.msra.mxu0 0.0
        %1522 = vmatprep.subr.mxu0 0.0
        %1523 = vmatpush1.msra.mxu0 0.0
        %1524 = vmatprep.subr.mxu0 0.0
        %1525 = vmatpush1.msra.mxu0 0.0
        %1526 = vmatprep.subr.mxu0 0.0
        %1527 = vmatpush1.msra.mxu0 0.0
        %1528 = vmatprep.subr.mxu0 0.0
        %1529 = vmatpush1.msra.mxu0 0.0
        %1530 = vmatprep.subr.mxu0 0.0
        %1531 = vmatpush1.msra.mxu0 0.0
        %1532 = vmatprep.subr.mxu0 0.0
        %1533 = vmatpush1.msra.mxu0 0.0
        %1534 = vmatprep.subr.mxu0 0.0
        %1535 = vmatpush1.msra.mxu0 0.0
        %1536 = vmatprep.subr.mxu0 0.0
        %1537 = vmatpush1.msra.mxu0 0.0
        %1538 = vmatprep.subr.mxu0 0.0
        %1539 = vmatpush1.msra.mxu0 0.0
        %1540 = vmatprep.subr.mxu0 0.0
        %1541 = vmatpush1.msra.mxu0 0.0
        %1542 = vmatprep.subr.mxu0 0.0
        %1543 = vmatpush1.msra.mxu0 0.0
        %1544 = vmatprep.subr.mxu0 0.0
        %1545 = vmatpush1.msra.mxu0 0.0
        %1546 = vmatprep.subr.mxu0 0.0
        %1547 = vmatpush1.msra.mxu0 0.0
        %1548 = vmatprep.subr.mxu0 0.0
        %1549 = vmatpush1.msra.mxu0 0.0
        %1550 = vmatprep.mubr.f32.mxu0 0.0
        %1551 = vmatmul.mubr.f32.gmra.mrb[0].mxu0 %v1484
        %v1552 = vpop.f32.mrb[0].mxu0
        %v1553 = vadd.f32 0.0, %v1552
        %v1554 = vpop.f32.mrb[0].mxu0
        %1555 = vdwg.mxu0
        %1556 = vrot.lane.b32.xlu0 %v563, 104
        %v1557 = vpop.permute.xlu0 %1556
        %1558 = vrot.lane.b32.xlu0 %v560, 72
        %v1559 = vpop.permute.xlu0 %1558
        %v1560 = vsel %vm567, %v1557, 0
        %v1562 = vsel %vm567, %v1559, 0
        %1564 = vmatprep.subr.mxu0 0.0
        %1565 = vmatpush1.xpose.msra.mxu0 %v1562
        %1566 = vmatprep.subr.mxu0 0.0
        %1567 = vmatpush1.xpose.msra.mxu0 0.0
        %1568 = vmatprep.subr.mxu0 0.0
        %1569 = vmatpush1.xpose.msra.mxu0 0.0
        %1570 = vmatprep.subr.mxu0 0.0
        %1571 = vmatpush1.xpose.msra.mxu0 0.0
        %1572 = vmatprep.subr.mxu0 0.0
        %1573 = vmatpush1.xpose.msra.mxu0 0.0
        %1574 = vmatprep.subr.mxu0 0.0
        %1575 = vmatpush1.xpose.msra.mxu0 0.0
        %1576 = vmatprep.subr.mxu0 0.0
        %1577 = vmatpush1.xpose.msra.mxu0 0.0
        %1578 = vmatprep.subr.mxu0 0.0
        %1579 = vmatpush1.xpose.msra.mxu0 0.0
        %1580 = vmatprep.subr.mxu0 0.0
        %1581 = vmatpush1.xpose.msra.mxu0 0.0
        %1582 = vmatprep.subr.mxu0 0.0
        %1583 = vmatpush1.xpose.msra.mxu0 0.0
        %1584 = vmatprep.subr.mxu0 0.0
        %1585 = vmatpush1.xpose.msra.mxu0 0.0
        %1586 = vmatprep.subr.mxu0 0.0
        %1587 = vmatpush1.xpose.msra.mxu0 0.0
        %1588 = vmatprep.subr.mxu0 0.0
        %1589 = vmatpush1.xpose.msra.mxu0 0.0
        %1590 = vmatprep.subr.mxu0 0.0
        %1591 = vmatpush1.xpose.msra.mxu0 0.0
        %1592 = vmatprep.subr.mxu0 0.0
        %1593 = vmatpush1.xpose.msra.mxu0 0.0
        %1594 = vmatprep.subr.mxu0 0.0
        %1595 = vmatpush1.xpose.msra.mxu0 0.0
        %1596 = vmatprep.subr.mxu0 0.0
        %1597 = vmatpush1.xpose.msra.mxu0 0.0
        %1598 = vmatprep.subr.mxu0 0.0
        %1599 = vmatpush1.xpose.msra.mxu0 0.0
        %1600 = vmatprep.subr.mxu0 0.0
        %1601 = vmatpush1.xpose.msra.mxu0 0.0
        %1602 = vmatprep.subr.mxu0 0.0
        %1603 = vmatpush1.xpose.msra.mxu0 0.0
        %1604 = vmatprep.subr.mxu0 0.0
        %1605 = vmatpush1.xpose.msra.mxu0 0.0
        %1606 = vmatprep.subr.mxu0 0.0
        %1607 = vmatpush1.xpose.msra.mxu0 0.0
        %1608 = vmatprep.subr.mxu0 0.0
        %1609 = vmatpush1.xpose.msra.mxu0 0.0
        %1610 = vmatprep.subr.mxu0 0.0
        %1611 = vmatpush1.xpose.msra.mxu0 0.0
        %1612 = vmatprep.subr.mxu0 0.0
        %1613 = vmatpush1.xpose.msra.mxu0 0.0
        %1614 = vmatprep.subr.mxu0 0.0
        %1615 = vmatpush1.xpose.msra.mxu0 0.0
        %1616 = vmatprep.subr.mxu0 0.0
        %1617 = vmatpush1.xpose.msra.mxu0 0.0
        %1618 = vmatprep.subr.mxu0 0.0
        %1619 = vmatpush1.xpose.msra.mxu0 0.0
        %1620 = vmatprep.subr.mxu0 0.0
        %1621 = vmatpush1.xpose.msra.mxu0 0.0
        %1622 = vmatprep.subr.mxu0 0.0
        %1623 = vmatpush1.xpose.msra.mxu0 0.0
        %1624 = vmatprep.subr.mxu0 0.0
        %1625 = vmatpush1.xpose.msra.mxu0 0.0
        %1626 = vmatprep.subr.mxu0 0.0
        %1627 = vmatpush1.xpose.msra.mxu0 0.0
        %1628 = vmatprep.mubr.f32.mxu0 0.0
        %1629 = vmatmul.mubr.f32.gmra.mrb[0].mxu0 %v1560
        %v1630 = vpop.f32.mrb[0].mxu0
        %v1631 = vadd.f32 0.0, %v1630
        %v1632 = vpop.f32.mrb[0].mxu0
        %1633 = vdwg.mxu0
        %v1634 = vsel %vm643, %v1631, -inf
        %1635 = vmax.xlane.f32.xlu0 %v1634
        %v1636 = vpop.xlane.xlu0 %1635
        %v1637 = vsub.f32 %v1631, %v1636
        %v1638 = vmul.f32 %v1637, 1.442695
        %v1639 = vpow.pop %v1638
        %v1640 = vsel %vm643, %v1639, 0.0
        %1641 = vadd.xlane.f32.xlu0 %v1640
        %v1642 = vpop.xlane.xlu0 %1641
        %v1643 = vrcp.pop %v1642
        %v1644 = vmul.f32 %v1639, %v1643
        %1645 = vrot.lane.b32.xlu0 %v560, 40
        %v1646 = vpop.permute.xlu0 %1645
        %v1649 = vsel %vm643, %v1644, 0
        %1651 = vmatprep.subr.mxu0 0.0
        %1652 = vmatpush1.msra.mxu0 %v1646
        %1653 = vmatprep.subr.mxu0 0.0
        %1654 = vmatpush1.msra.mxu0 0.0
        %1655 = vmatprep.subr.mxu0 0.0
        %1656 = vmatpush1.msra.mxu0 0.0
        %1657 = vmatprep.subr.mxu0 0.0
        %1658 = vmatpush1.msra.mxu0 0.0
        %1659 = vmatprep.subr.mxu0 0.0
        %1660 = vmatpush1.msra.mxu0 0.0
        %1661 = vmatprep.subr.mxu0 0.0
        %1662 = vmatpush1.msra.mxu0 0.0
        %1663 = vmatprep.subr.mxu0 0.0
        %1664 = vmatpush1.msra.mxu0 0.0
        %1665 = vmatprep.subr.mxu0 0.0
        %1666 = vmatpush1.msra.mxu0 0.0
        %1667 = vmatprep.subr.mxu0 0.0
        %1668 = vmatpush1.msra.mxu0 0.0
        %1669 = vmatprep.subr.mxu0 0.0
        %1670 = vmatpush1.msra.mxu0 0.0
        %1671 = vmatprep.subr.mxu0 0.0
        %1672 = vmatpush1.msra.mxu0 0.0
        %1673 = vmatprep.subr.mxu0 0.0
        %1674 = vmatpush1.msra.mxu0 0.0
        %1675 = vmatprep.subr.mxu0 0.0
        %1676 = vmatpush1.msra.mxu0 0.0
        %1677 = vmatprep.subr.mxu0 0.0
        %1678 = vmatpush1.msra.mxu0 0.0
        %1679 = vmatprep.subr.mxu0 0.0
        %1680 = vmatpush1.msra.mxu0 0.0
        %1681 = vmatprep.subr.mxu0 0.0
        %1682 = vmatpush1.msra.mxu0 0.0
        %1683 = vmatprep.subr.mxu0 0.0
        %1684 = vmatpush1.msra.mxu0 0.0
        %1685 = vmatprep.subr.mxu0 0.0
        %1686 = vmatpush1.msra.mxu0 0.0
        %1687 = vmatprep.subr.mxu0 0.0
        %1688 = vmatpush1.msra.mxu0 0.0
        %1689 = vmatprep.subr.mxu0 0.0
        %1690 = vmatpush1.msra.mxu0 0.0
        %1691 = vmatprep.subr.mxu0 0.0
        %1692 = vmatpush1.msra.mxu0 0.0
        %1693 = vmatprep.subr.mxu0 0.0
        %1694 = vmatpush1.msra.mxu0 0.0
        %1695 = vmatprep.subr.mxu0 0.0
        %1696 = vmatpush1.msra.mxu0 0.0
        %1697 = vmatprep.subr.mxu0 0.0
        %1698 = vmatpush1.msra.mxu0 0.0
        %1699 = vmatprep.subr.mxu0 0.0
        %1700 = vmatpush1.msra.mxu0 0.0
        %1701 = vmatprep.subr.mxu0 0.0
        %1702 = vmatpush1.msra.mxu0 0.0
        %1703 = vmatprep.subr.mxu0 0.0
        %1704 = vmatpush1.msra.mxu0 0.0
        %1705 = vmatprep.subr.mxu0 0.0
        %1706 = vmatpush1.msra.mxu0 0.0
        %1707 = vmatprep.subr.mxu0 0.0
        %1708 = vmatpush1.msra.mxu0 0.0
        %1709 = vmatprep.subr.mxu0 0.0
        %1710 = vmatpush1.msra.mxu0 0.0
        %1711 = vmatprep.subr.mxu0 0.0
        %1712 = vmatpush1.msra.mxu0 0.0
        %1713 = vmatprep.subr.mxu0 0.0
        %1714 = vmatpush1.msra.mxu0 0.0
        %1715 = vmatprep.mubr.f32.mxu0 0.0
        %1716 = vmatmul.mubr.f32.gmra.mrb[0].mxu0 %v1649
        %v1717 = vpop.f32.mrb[0].mxu0
        %v1718 = vadd.f32 0.0, %v1717
        %v1719 = vpop.f32.mrb[0].mxu0
        %1720 = vdwg.mxu0
        %1721 = vrot.lane.b32.xlu0 %v563, 100
        %v1722 = vpop.permute.xlu0 %1721
        %1723 = vrot.lane.b32.xlu0 %v560, 68
        %v1724 = vpop.permute.xlu0 %1723
        %v1725 = vsel %vm567, %v1722, 0
        %v1727 = vsel %vm567, %v1724, 0
        %1729 = vmatprep.subr.mxu0 0.0
        %1730 = vmatpush1.xpose.msra.mxu0 %v1727
        %1731 = vmatprep.subr.mxu0 0.0
        %1732 = vmatpush1.xpose.msra.mxu0 0.0
        %1733 = vmatprep.subr.mxu0 0.0
        %1734 = vmatpush1.xpose.msra.mxu0 0.0
        %1735 = vmatprep.subr.mxu0 0.0
        %1736 = vmatpush1.xpose.msra.mxu0 0.0
        %1737 = vmatprep.subr.mxu0 0.0
        %1738 = vmatpush1.xpose.msra.mxu0 0.0
        %1739 = vmatprep.subr.mxu0 0.0
        %1740 = vmatpush1.xpose.msra.mxu0 0.0
        %1741 = vmatprep.subr.mxu0 0.0
        %1742 = vmatpush1.xpose.msra.mxu0 0.0
        %1743 = vmatprep.subr.mxu0 0.0
        %1744 = vmatpush1.xpose.msra.mxu0 0.0
        %1745 = vmatprep.subr.mxu0 0.0
        %1746 = vmatpush1.xpose.msra.mxu0 0.0
        %1747 = vmatprep.subr.mxu0 0.0
        %1748 = vmatpush1.xpose.msra.mxu0 0.0
        %1749 = vmatprep.subr.mxu0 0.0
        %1750 = vmatpush1.xpose.msra.mxu0 0.0
        %1751 = vmatprep.subr.mxu0 0.0
        %1752 = vmatpush1.xpose.msra.mxu0 0.0
        %1753 = vmatprep.subr.mxu0 0.0
        %1754 = vmatpush1.xpose.msra.mxu0 0.0
        %1755 = vmatprep.subr.mxu0 0.0
        %1756 = vmatpush1.xpose.msra.mxu0 0.0
        %1757 = vmatprep.subr.mxu0 0.0
        %1758 = vmatpush1.xpose.msra.mxu0 0.0
        %1759 = vmatprep.subr.mxu0 0.0
        %1760 = vmatpush1.xpose.msra.mxu0 0.0
        %1761 = vmatprep.subr.mxu0 0.0
        %1762 = vmatpush1.xpose.msra.mxu0 0.0
        %1763 = vmatprep.subr.mxu0 0.0
        %1764 = vmatpush1.xpose.msra.mxu0 0.0
        %1765 = vmatprep.subr.mxu0 0.0
        %1766 = vmatpush1.xpose.msra.mxu0 0.0
        %1767 = vmatprep.subr.mxu0 0.0
        %1768 = vmatpush1.xpose.msra.mxu0 0.0
        %1769 = vmatprep.subr.mxu0 0.0
        %1770 = vmatpush1.xpose.msra.mxu0 0.0
        %1771 = vmatprep.subr.mxu0 0.0
        %1772 = vmatpush1.xpose.msra.mxu0 0.0
        %1773 = vmatprep.subr.mxu0 0.0
        %1774 = vmatpush1.xpose.msra.mxu0 0.0
        %1775 = vmatprep.subr.mxu0 0.0
        %1776 = vmatpush1.xpose.msra.mxu0 0.0
        %1777 = vmatprep.subr.mxu0 0.0
        %1778 = vmatpush1.xpose.msra.mxu0 0.0
        %1779 = vmatprep.subr.mxu0 0.0
        %1780 = vmatpush1.xpose.msra.mxu0 0.0
        %1781 = vmatprep.subr.mxu0 0.0
        %1782 = vmatpush1.xpose.msra.mxu0 0.0
        %1783 = vmatprep.subr.mxu0 0.0
        %1784 = vmatpush1.xpose.msra.mxu0 0.0
        %1785 = vmatprep.subr.mxu0 0.0
        %1786 = vmatpush1.xpose.msra.mxu0 0.0
        %1787 = vmatprep.subr.mxu0 0.0
        %1788 = vmatpush1.xpose.msra.mxu0 0.0
        %1789 = vmatprep.subr.mxu0 0.0
        %1790 = vmatpush1.xpose.msra.mxu0 0.0
        %1791 = vmatprep.subr.mxu0 0.0
        %1792 = vmatpush1.xpose.msra.mxu0 0.0
        %1793 = vmatprep.mubr.f32.mxu0 0.0
        %1794 = vmatmul.mubr.f32.gmra.mrb[0].mxu0 %v1725
        %v1795 = vpop.f32.mrb[0].mxu0
        %v1796 = vadd.f32 0.0, %v1795
        %v1797 = vpop.f32.mrb[0].mxu0
        %1798 = vdwg.mxu0
        %v1799 = vsel %vm643, %v1796, -inf
        %1800 = vmax.xlane.f32.xlu0 %v1799
        %v1801 = vpop.xlane.xlu0 %1800
        %v1802 = vsub.f32 %v1796, %v1801
        %v1803 = vmul.f32 %v1802, 1.442695
        %v1804 = vpow.pop %v1803
        %v1805 = vsel %vm643, %v1804, 0.0
        %1806 = vadd.xlane.f32.xlu0 %v1805
        %v1807 = vpop.xlane.xlu0 %1806
        %v1808 = vrcp.pop %v1807
        %v1809 = vmul.f32 %v1804, %v1808
        %1810 = vrot.lane.b32.xlu0 %v560, 36
        %v1811 = vpop.permute.xlu0 %1810
        %v1814 = vsel %vm643, %v1809, 0
        %1816 = vmatprep.subr.mxu0 0.0
        %1817 = vmatpush1.msra.mxu0 %v1811
        %1818 = vmatprep.subr.mxu0 0.0
        %1819 = vmatpush1.msra.mxu0 0.0
        %1820 = vmatprep.subr.mxu0 0.0
        %1821 = vmatpush1.msra.mxu0 0.0
        %1822 = vmatprep.subr.mxu0 0.0
        %1823 = vmatpush1.msra.mxu0 0.0
        %1824 = vmatprep.subr.mxu0 0.0
        %1825 = vmatpush1.msra.mxu0 0.0
        %1826 = vmatprep.subr.mxu0 0.0
        %1827 = vmatpush1.msra.mxu0 0.0
        %1828 = vmatprep.subr.mxu0 0.0
        %1829 = vmatpush1.msra.mxu0 0.0
        %1830 = vmatprep.subr.mxu0 0.0
        %1831 = vmatpush1.msra.mxu0 0.0
        %1832 = vmatprep.subr.mxu0 0.0
        %1833 = vmatpush1.msra.mxu0 0.0
        %1834 = vmatprep.subr.mxu0 0.0
        %1835 = vmatpush1.msra.mxu0 0.0
        %1836 = vmatprep.subr.mxu0 0.0
        %1837 = vmatpush1.msra.mxu0 0.0
        %1838 = vmatprep.subr.mxu0 0.0
        %1839 = vmatpush1.msra.mxu0 0.0
        %1840 = vmatprep.subr.mxu0 0.0
        %1841 = vmatpush1.msra.mxu0 0.0
        %1842 = vmatprep.subr.mxu0 0.0
        %1843 = vmatpush1.msra.mxu0 0.0
        %1844 = vmatprep.subr.mxu0 0.0
        %1845 = vmatpush1.msra.mxu0 0.0
        %1846 = vmatprep.subr.mxu0 0.0
        %1847 = vmatpush1.msra.mxu0 0.0
        %1848 = vmatprep.subr.mxu0 0.0
        %1849 = vmatpush1.msra.mxu0 0.0
        %1850 = vmatprep.subr.mxu0 0.0
        %1851 = vmatpush1.msra.mxu0 0.0
        %1852 = vmatprep.subr.mxu0 0.0
        %1853 = vmatpush1.msra.mxu0 0.0
        %1854 = vmatprep.subr.mxu0 0.0
        %1855 = vmatpush1.msra.mxu0 0.0
        %1856 = vmatprep.subr.mxu0 0.0
        %1857 = vmatpush1.msra.mxu0 0.0
        %1858 = vmatprep.subr.mxu0 0.0
        %1859 = vmatpush1.msra.mxu0 0.0
        %1860 = vmatprep.subr.mxu0 0.0
        %1861 = vmatpush1.msra.mxu0 0.0
        %1862 = vmatprep.subr.mxu0 0.0
        %1863 = vmatpush1.msra.mxu0 0.0
        %1864 = vmatprep.subr.mxu0 0.0
        %1865 = vmatpush1.msra.mxu0 0.0
        %1866 = vmatprep.subr.mxu0 0.0
        %1867 = vmatpush1.msra.mxu0 0.0
        %1868 = vmatprep.subr.mxu0 0.0
        %1869 = vmatpush1.msra.mxu0 0.0
        %1870 = vmatprep.subr.mxu0 0.0
        %1871 = vmatpush1.msra.mxu0 0.0
        %1872 = vmatprep.subr.mxu0 0.0
        %1873 = vmatpush1.msra.mxu0 0.0
        %1874 = vmatprep.subr.mxu0 0.0
        %1875 = vmatpush1.msra.mxu0 0.0
        %1876 = vmatprep.subr.mxu0 0.0
        %1877 = vmatpush1.msra.mxu0 0.0
        %1878 = vmatprep.subr.mxu0 0.0
        %1879 = vmatpush1.msra.mxu0 0.0
        %1880 = vmatprep.mubr.f32.mxu0 0.0
        %1881 = vmatmul.mubr.f32.gmra.mrb[0].mxu0 %v1814
        %v1882 = vpop.f32.mrb[0].mxu0
        %v1883 = vadd.f32 0.0, %v1882
        %v1884 = vpop.f32.mrb[0].mxu0
        %1885 = vdwg.mxu0
        %1887 = vrot.lane.b32.xlu0 %v893, 4
        %v1888 = vpop.permute.xlu0 %1887
        %1891 = vrot.lane.b32.xlu0 %v1058, 8
        %v1892 = vpop.permute.xlu0 %1891
        %1895 = vrot.lane.b32.xlu0 %v1223, 12
        %v1896 = vpop.permute.xlu0 %1895
        %1899 = vrot.lane.b32.xlu0 %v1388, 16
        %v1900 = vpop.permute.xlu0 %1899
        %1903 = vrot.lane.b32.xlu0 %v1553, 20
        %v1904 = vpop.permute.xlu0 %1903
        %1907 = vrot.lane.b32.xlu0 %v1718, 24
        %v1908 = vpop.permute.xlu0 %1907
        %1911 = vrot.lane.b32.xlu0 %v1883, 28
        %v1912 = vpop.permute.xlu0 %1911
        %v1914 = vsel %vm567, %v728, %v1888
        %v1915 = vsel %vm643, %v1914, %v1892
        %vm1916 = vcmask 97280
        %v1917 = vsel %vm1916, %v1915, %v1896
        %vm1918 = vcmask 130048
        %v1919 = vsel %vm1918, %v1917, %v1900
        %vm1920 = vcmask 162816
        %v1921 = vsel %vm1920, %v1919, %v1904
        %vm1922 = vcmask 195584
        %v1923 = vsel %vm1922, %v1921, %v1908
        %vm1924 = vcmask 228352
        %v1925 = vsel %vm1924, %v1923, %v1912
        %v1926 = vld [vmem:[%s6] sm:$0xff]
        %v1927 = vld [vmem:[%s6 + $0x8] sm:$0xff]
        %v1928 = vld [vmem:[%s6 + $0x10] sm:$0xff]
        %v1929 = vld [vmem:[%s6 + $0x18] sm:$0xff]
        %v1930 = vld [vmem:[#allocation9] sm:$0x1]
        %v1932 = vlaneseq
        %v1933 = vshrl.u32 %v1932, 7
        %v1934 = vsub.s32 0, %v1933
        %v1935 = vrot.slane %v1930, %v1934
        %v1938 = vsel %vm448, %v1925, 0
        %1940 = vmatprep.subr.mxu0 0.0
        %1941 = vmatpush1.msra.mxu0 %v1926
        %1942 = vmatprep.subr.mxu0 0.0
        %1943 = vmatpush1.msra.mxu0 %v1927
        %1944 = vmatprep.subr.mxu0 0.0
        %1945 = vmatpush1.msra.mxu0 %v1928
        %1946 = vmatprep.subr.mxu0 0.0
        %1947 = vmatpush1.msra.mxu0 %v1929
        %1948 = vmatprep.subr.mxu0 0.0
        %1949 = vmatpush1.msra.mxu0 0.0
        %1950 = vmatprep.subr.mxu0 0.0
        %1951 = vmatpush1.msra.mxu0 0.0
        %1952 = vmatprep.subr.mxu0 0.0
        %1953 = vmatpush1.msra.mxu0 0.0
        %1954 = vmatprep.subr.mxu0 0.0
        %1955 = vmatpush1.msra.mxu0 0.0
        %1956 = vmatprep.subr.mxu0 0.0
        %1957 = vmatpush1.msra.mxu0 0.0
        %1958 = vmatprep.subr.mxu0 0.0
        %1959 = vmatpush1.msra.mxu0 0.0
        %1960 = vmatprep.subr.mxu0 0.0
        %1961 = vmatpush1.msra.mxu0 0.0
        %1962 = vmatprep.subr.mxu0 0.0
        %1963 = vmatpush1.msra.mxu0 0.0
        %1964 = vmatprep.subr.mxu0 0.0
        %1965 = vmatpush1.msra.mxu0 0.0
        %1966 = vmatprep.subr.mxu0 0.0
        %1967 = vmatpush1.msra.mxu0 0.0
        %1968 = vmatprep.subr.mxu0 0.0
        %1969 = vmatpush1.msra.mxu0 0.0
        %1970 = vmatprep.subr.mxu0 0.0
        %1971 = vmatpush1.msra.mxu0 0.0
        %1972 = vmatprep.subr.mxu0 0.0
        %1973 = vmatpush1.msra.mxu0 0.0
        %1974 = vmatprep.subr.mxu0 0.0
        %1975 = vmatpush1.msra.mxu0 0.0
        %1976 = vmatprep.subr.mxu0 0.0
        %1977 = vmatpush1.msra.mxu0 0.0
        %1978 = vmatprep.subr.mxu0 0.0
        %1979 = vmatpush1.msra.mxu0 0.0
        %1980 = vmatprep.subr.mxu0 0.0
        %1981 = vmatpush1.msra.mxu0 0.0
        %1982 = vmatprep.subr.mxu0 0.0
        %1983 = vmatpush1.msra.mxu0 0.0
        %1984 = vmatprep.subr.mxu0 0.0
        %1985 = vmatpush1.msra.mxu0 0.0
        %1986 = vmatprep.subr.mxu0 0.0
        %1987 = vmatpush1.msra.mxu0 0.0
        %1988 = vmatprep.subr.mxu0 0.0
        %1989 = vmatpush1.msra.mxu0 0.0
        %1990 = vmatprep.subr.mxu0 0.0
        %1991 = vmatpush1.msra.mxu0 0.0
        %1992 = vmatprep.subr.mxu0 0.0
        %1993 = vmatpush1.msra.mxu0 0.0
        %1994 = vmatprep.subr.mxu0 0.0
        %1995 = vmatpush1.msra.mxu0 0.0
        %1996 = vmatprep.subr.mxu0 0.0
        %1997 = vmatpush1.msra.mxu0 0.0
        %1998 = vmatprep.subr.mxu0 0.0
        %1999 = vmatpush1.msra.mxu0 0.0
        %2000 = vmatprep.subr.mxu0 0.0
        %2001 = vmatpush1.msra.mxu0 0.0
        %2002 = vmatprep.subr.mxu0 0.0
        %2003 = vmatpush1.msra.mxu0 0.0
        %2004 = vmatprep.mubr.f32.mxu0 0.0
        %2005 = vmatmul.mubr.f32.gmra.mrb[0].mxu0 %v1938
        %v2006 = vpop.f32.mrb[0].mxu0
        %v2007 = vadd.f32 %v1935, %v2006
        %v2008 = vpop.f32.mrb[0].mxu0
        %2009 = vdwg.mxu0
        %v2010 = vadd.f32 %v2007, %v478
        %v2011 = vld [vmem:[#allocation10] sm:$0x1]
        %v2012 = vld [vmem:[#allocation12] sm:$0x1]
        %v2013 = vsel %vm448, %v2010, 0.0
        %2014 = vadd.xlane.f32.xlu0 %v2013
        %v2015 = vpop.xlane.xlu0 %2014
        %v2016 = vmul.f32 %v2015, %v452
        %v2017 = vsub.f32 %v2010, %v2016
        %v2018 = vmul.f32 %v2017, %v2017
        %v2019 = vsel %vm448, %v2018, 0.0
        %2020 = vadd.xlane.f32.xlu0 %v2019
        %v2021 = vpop.xlane.xlu0 %2020
        %v2022 = vmul.f32 %v2021, %v452
        %v2023 = vadd.f32 %v2022, 1e-05
        %v2024 = vrsqrt.pop %v2023
        %v2025 = vmul.f32 %v2017, %v2024
        %v2027 = vlaneseq
        %v2028 = vshrl.u32 %v2027, 7
        %v2029 = vsub.s32 0, %v2028
        %v2030 = vrot.slane %v2011, %v2029
        %v2032 = vmul.f32 %v2025, %v2030
        %v2034 = vlaneseq
        %v2035 = vshrl.u32 %v2034, 7
        %v2036 = vsub.s32 0, %v2035
        %v2037 = vrot.slane %v2012, %v2036
        %v2039 = vadd.f32 %v2032, %v2037
        %v2040 = vadd.f32 %v2039, %v445
        %2041 = vst.msk [vmem:[%s444] sm:$0xff] %vm448, %v2040
        %p2042 = scmp.lt.s32.totalorder %s25, 1
        %s2043 = scalar_select %p2042, %s25, 1
        %s2044 = smul.addr %s2043, 8
        %s2045 = scalar_lea.vmem %s10, %s2044
        // Predicated region
        $region89: #{multi_head_self_attention_forward.1} parent=59 // pred_check
          %p2046 = pneg %p258
        $region90: #{multi_head_self_attention_forward.1} parent=59 // pred_check_branch
          %2048 = sbr.rel (%p2046) target = $region92
        $region91: #{multi_head_self_attention_forward.1} parent=59 // pred_region
          _
        $region92: #{multi_head_self_attention_forward.1} parent=59 // pred_fallthru
          _
      $region60: #{multi_head_self_attention_forward.1} parent=5 // pred_fallthru
        _
      %p2049 = scmp.le.s32.totalorder 2, %s20
      // Predicated region
      $region93: #{multi_head_self_attention_forward.1} parent=5 // pred_check
        %p2050 = pneg %p2049
      $region94: #{multi_head_self_attention_forward.1} parent=5 // pred_check_branch
        %2052 = sbr.rel (%p2050) target = $region96
      $region95: #{multi_head_self_attention_forward.1} parent=5 // pred_region
        %s2053 = ssub.s32 %s20, 2
        // Predicated region
        $region97: #{multi_head_self_attention_forward.1} parent=95 // pred_check
          %p2054 = pneg %p264
        $region98: #{multi_head_self_attention_forward.1} parent=95 // pred_check_branch
          %2056 = sbr.rel (%p2054) target = $region100
        $region99: #{multi_head_self_attention_forward.1} parent=95 // pred_region
          %p2057 = scmp.lt.s32.totalorder %s26, 1
          %s2058 = scalar_select %p2057, %s26, 1
          %s2059 = smul.addr %s2058, 8
          %s2060 = scalar_lea.vmem %s10, %s2059
        $region100: #{multi_head_self_attention_forward.1} parent=95 // pred_fallthru
          _
      $region96: #{multi_head_self_attention_forward.1} parent=5 // pred_fallthru
        _
    $region6: #{multi_head_self_attention_forward.1} parent=1 // loop_footer
      %s24 = sadd.s32 1, %s20
    $region7: #{multi_head_self_attention_forward.1} parent=1 // loop_footer_branch
      %19 = sbr.rel target = $region3
    $region8: #{multi_head_self_attention_forward.1} parent=1 // loop_exit
      _
    %2061 = vsyncpa [#allocation3], 1
    %s2062 = scalar_lea.sflag [#allocation3], 1
    %2063 = vsyncpa %s2062, 1
    %2064 = vsyncpa [#allocation5], 1
    %2065 = vsyncpa [#allocation8], 1
    %2066 = vsyncpa [#allocation11], 1

</llo_original>
